<compile_context>
chip_gen: v6e
topology: v6e:2x2x1
jax: 0.10.0
libtpu: 0.0.40
codegen_flags: <defaults>
</compile_context>

<pallas_src>
import math

import jax
import jax.numpy as jnp
from jax.experimental import pallas as pl
from jax.experimental.pallas import tpu as pltpu


def _attn_kernel(mask_ref, q_ref, k_ref, v_ref, o_ref):
    """One grid step: Hblk heads of full (S, D) attention.

    q/k/v blocks: (Hblk, S, D) in the compute dtype (bf16 by default);
    o block: (Hblk, S, D) in the output dtype; mask: (S, S) f32, resident.
    """
    scale = 1.0 / math.sqrt(q_ref.shape[-1])

    # QK^T contracting the LAST dim of both operands (batched dot_general):
    # no materialized K transpose on the way into the MXU. bf16 operands give
    # single-pass MXU; preferred_element_type keeps the accumulation in f32.
    s = jnp.einsum("hqd,hkd->hqk", q_ref[...], k_ref[...],
                   preferred_element_type=jnp.float32)

    # Scale the f32 scores (smaller than q per head when D > S, as in the
    # module's production shape, and leaves the bf16 q operand unrounded),
    # fused with the mask add. Softmax elementwise math stays f32.
    s = s * scale + mask_ref[...]               # (S,S) mask broadcast over heads

    # Numerically stable softmax; normalization deferred past the PV matmul.
    m = jnp.max(s, axis=-1, keepdims=True)
    p = jnp.exp(s - m)                           # unnormalized probabilities
    denom = jnp.sum(p, axis=-1, keepdims=True)   # (Hblk, S, 1)

    # dropout(p=0.0) is the identity -> skipped.

    # PV matmul on the unnormalized probabilities (cast to the bf16 compute
    # dtype for single-pass MXU), then normalize the (Hblk, S, D) output.
    out = jnp.einsum("hqk,hkd->hqd", p.astype(v_ref.dtype), v_ref[...],
                     preferred_element_type=jnp.float32)
    inv = pl.reciprocal(denom, approx=False)     # exact: denom is tiny (Hblk,S,1)
    o_ref[...] = (out * inv).astype(o_ref.dtype)


def _vmem_capacity_bytes():
    """Physical VMEM per TensorCore (v5e/v6e: 128 MiB, v7x: 64 MiB)."""
    try:
        cap = getattr(pltpu.get_tpu_info(), "vmem_capacity_bytes", None)
        if cap:
            return int(cap)
    except Exception:
        pass
    return 64 * 1024 * 1024   # conservative fallback (= v7x)


def _per_head_vmem_bytes(s, d, qkv_itemsize, out_itemsize):
    """Per-head-per-step VMEM: double-buffered q/k/v/o blocks + f32 score /
    exp / broadcast temporaries + f32 pre-normalization output temp."""
    blocks = 2 * (3 * s * d * qkv_itemsize + s * d * out_itemsize)
    temps = 4 * s * s * 4 + 2 * s * d * 4
    return blocks + temps


def _pick_head_block(bh, s, d, qkv_itemsize, out_itemsize, budget_bytes,
                     mask_bytes):
    """Heads per grid step: big enough to amortize per-step overhead and give
    large DMAs, small enough for the VMEM budget, and keeping >= 4 grid steps
    (>= 2 per TensorCore on v7x megacore) when possible so prefetch-next /
    compute-current pipelining survives on each core."""
    per_head = _per_head_vmem_bytes(s, d, qkv_itemsize, out_itemsize)
    cap = max(1, (budget_bytes - mask_bytes) // per_head)
    if bh >= 4:
        cap = min(cap, bh // 4)
    elif bh >= 2:
        cap = min(cap, bh // 2)
    hblk = max(1, int(cap))
    while bh % hblk:                 # must divide the flattened head count
        hblk -= 1
    return hblk


def attention_pallas(query, key, value, attn_mask, compute_dtype=jnp.bfloat16):
    B, H, S, D = query.shape
    assert attn_mask.shape == (1, 1, S, S), "mask must be (1,1,S,S) (broadcast over B, H)"
    BH = B * H

    cdt = jnp.dtype(compute_dtype) if compute_dtype is not None else jnp.dtype(query.dtype)
    out_dtype = query.dtype
    out_itemsize = jnp.dtype(out_dtype).itemsize

    # Cast matmul operands in the wrapper so the HBM->VMEM DMAs shrink (bf16
    # halves the q/k/v traffic of this near-memory-bound kernel); the mask is
    # kept f32 so all softmax elementwise math stays f32.
    q = query.reshape(BH, S, D).astype(cdt)
    k = key.reshape(BH, S, D).astype(cdt)
    v = value.reshape(BH, S, D).astype(cdt)
    mask = attn_mask.reshape(S, S).astype(jnp.float32)

    vmem_cap = _vmem_capacity_bytes()
    # Generation-aware Hblk budget: ~40% of physical VMEM
    # (~51 MiB on v5e/v6e's 128 MiB, ~25 MiB on v7x's 64 MiB).
    budget = int(0.40 * vmem_cap)
    mask_bytes = S * S * 4                      # single-buffered resident mask
    hblk = _pick_head_block(BH, S, D, cdt.itemsize, out_itemsize, budget, mask_bytes)

    per_head = _per_head_vmem_bytes(S, D, cdt.itemsize, out_itemsize)
    if mask_bytes + per_head > int(0.85 * vmem_cap):
        # TODO(synk): flash-style kv tiling (second "arbitrary" grid axis with
        # online softmax, head axis stays "parallel") for S large enough that a
        # whole (S,S) score tile no longer fits VMEM (~S>=2048 bf16 on v7x).
        raise NotImplementedError("sequence too long for the whole-(S,S) score strategy")

    grid = (BH // hblk,)
    est_vmem = mask_bytes + hblk * per_head
    vmem_limit = int(min(0.85 * vmem_cap, max(32 * 1024 * 1024, 2 * est_vmem)))

    # Advisory cost estimate so XLA schedules surrounding ops sensibly.
    flops = 4 * BH * S * S * D                              # two matmuls
    transcendentals = BH * S * S                            # exp
    bytes_accessed = BH * S * D * (3 * cdt.itemsize + out_itemsize) + S * S * 4

    def _call(mask_pipeline_mode):
        if mask_pipeline_mode is None:
            mask_spec = pl.BlockSpec((S, S), lambda i: (0, 0))
        else:
            # Constant index_map + single buffer: DMA'd once, stays resident,
            # and doesn't burn a second (S,S) VMEM buffer.
            mask_spec = pl.BlockSpec((S, S), lambda i: (0, 0),
                                     pipeline_mode=mask_pipeline_mode)
        return pl.pallas_call(
            _attn_kernel,
            out_shape=jax.ShapeDtypeStruct((BH, S, D), out_dtype),
            grid_spec=pltpu.PrefetchScalarGridSpec(
                num_scalar_prefetch=0,
                grid=grid,
                in_specs=[
                    mask_spec,
                    pl.BlockSpec((hblk, S, D), lambda i: (i, 0, 0)),  # q
                    pl.BlockSpec((hblk, S, D), lambda i: (i, 0, 0)),  # k
                    pl.BlockSpec((hblk, S, D), lambda i: (i, 0, 0)),  # v
                ],
                out_specs=pl.BlockSpec((hblk, S, D), lambda i: (i, 0, 0)),
            ),
            compiler_params=pltpu.CompilerParams(
                dimension_semantics=("parallel",),
                vmem_limit_bytes=vmem_limit,
            ),
            cost_estimate=pl.CostEstimate(
                flops=flops,
                transcendentals=transcendentals,
                bytes_accessed=bytes_accessed,
            ),
        )(mask, q, k, v)

    try:
        out = _call(pl.Buffered(1))
    except Exception:
        # Fallback if this JAX build rejects buffer_count=1: default double
        # buffering only costs one extra (S,S) f32 VMEM buffer.
        out = _call(None)

    return out.reshape(B, H, S, D)


def attention_ref(query, key, value, attn_mask):
    scale = 1.0 / math.sqrt(query.shape[-1])
    qk = jnp.einsum("bhqd,bhkd->bhqk", query, key) * scale
    qk = qk + attn_mask
    w = jax.nn.softmax(qk, axis=-1)
    return jnp.einsum("bhqk,bhkd->bhqd", w, value)


if __name__ == "__main__":
    # Small shapes consistent with the module's attention semantics
    # (module is B=1, H=64, S=256, D=512; scaled down, lane-dense D=128).
    B, H, S, D = 1, 8, 128, 128
    key0 = jax.random.PRNGKey(0)
    kq, kk, kv, km = jax.random.split(key0, 4)

    query = jax.random.normal(kq, (B, H, S, D), dtype=jnp.float32)
    key_t = jax.random.normal(kk, (B, H, S, D), dtype=jnp.float32)
    value = jax.random.normal(kv, (B, H, S, D), dtype=jnp.float32)
    attn_mask = jax.random.normal(km, (1, 1, S, S), dtype=jnp.float32)

    ref = attention_ref(query, key_t, value, attn_mask)

    # f32 compute path first: validates kernel structure against the reference.
    out_f32 = attention_pallas(query, key_t, value, attn_mask, compute_dtype=None)
    jax.block_until_ready(out_f32)
    assert out_f32.shape == (B, H, S, D)
    err_f32 = float(jnp.max(jnp.abs(out_f32 - ref)))
    assert err_f32 < 2e-3, f"f32 path max abs err {err_f32}"

    # Default path: bf16 MXU operands, f32 accumulation + f32 softmax math.
    out = attention_pallas(query, key_t, value, attn_mask)
    jax.block_until_ready(out)
    assert out.shape == (B, H, S, D)
    err_bf16 = float(jnp.max(jnp.abs(out - ref)))
    assert err_bf16 < 5e-2, f"bf16 path max abs err {err_bf16}"

    print("KERNEL_OK")
</pallas_src>

<mosaic_0001>
module attributes {stable_mosaic.version = 11 : i64} {
  func.func @_attn_kernel(%arg0: i32, %arg1: memref<128x128xf32, #tpu.memory_space<vmem>>, %arg2: memref<2x128x128xf32, #tpu.memory_space<vmem>>, %arg3: memref<2x128x128xf32, #tpu.memory_space<vmem>>, %arg4: memref<2x128x128xf32, #tpu.memory_space<vmem>>, %arg5: memref<2x128x128xf32, #tpu.memory_space<vmem>>) attributes {dimension_semantics = [#tpu.dimension_semantics<parallel>], iteration_bounds = array<i64: 4>, scalar_prefetch = 0 : i64, scratch_operands = 0 : i64, tpu.core_type = #tpu.core_type<tc>, window_params = [{pipeline_mode = #tpu.pipeline_mode<synchronous>, transform_indices = @transform_0, window_bounds = array<i64: 128, 128>}, {transform_indices = @transform_1, window_bounds = array<i64: 2, 128, 128>}, {transform_indices = @transform_2, window_bounds = array<i64: 2, 128, 128>}, {transform_indices = @transform_3, window_bounds = array<i64: 2, 128, 128>}, {transform_indices = @transform_4, window_bounds = array<i64: 2, 128, 128>}]} {
    %c0 = arith.constant 0 : index
    %c0_0 = arith.constant 0 : index
    %c0_1 = arith.constant 0 : index
    %0 = vector.load %arg2[%c0, %c0_0, %c0_1] : memref<2x128x128xf32, #tpu.memory_space<vmem>>, vector<2x128x128xf32>
    %c0_2 = arith.constant 0 : index
    %c0_3 = arith.constant 0 : index
    %c0_4 = arith.constant 0 : index
    %1 = vector.load %arg3[%c0_2, %c0_3, %c0_4] : memref<2x128x128xf32, #tpu.memory_space<vmem>>, vector<2x128x128xf32>
    "tpu.trace_start"() <{level = 10 : i32, message = "hqd,hkd->hqk"}> : () -> ()
    %cst = arith.constant dense<0.000000e+00> : vector<2x128x128xf32>
    %2 = tpu.matmul %0, %1, %cst {dimension_numbers = #tpu.dot_dimension_numbers<[2], [2], [1], [1], [0, 0, 0, 1, 1, 1], [0], [0]>} : vector<2x128x128xf32>, vector<2x128x128xf32>, vector<2x128x128xf32> -> vector<2x128x128xf32>
    "tpu.trace_stop"() : () -> ()
    %cst_5 = arith.constant 0.0883883461 : f32
    %3 = vector.broadcast %cst_5 : f32 to vector<2x128x128xf32>
    %4 = arith.mulf %2, %3 : vector<2x128x128xf32>
    %c0_6 = arith.constant 0 : index
    %c0_7 = arith.constant 0 : index
    %5 = vector.load %arg1[%c0_6, %c0_7] : memref<128x128xf32, #tpu.memory_space<vmem>>, vector<128x128xf32>
    %6 = vector.shape_cast %5 : vector<128x128xf32> to vector<1x128x128xf32>
    %7 = vector.broadcast %6 : vector<1x128x128xf32> to vector<2x128x128xf32>
    %8 = arith.addf %4, %7 : vector<2x128x128xf32>
    %cst_8 = arith.constant dense<0xFF800000> : vector<2x128xf32>
    %9 = vector.multi_reduction <maximumf>, %8, %cst_8 [2] : vector<2x128x128xf32> to vector<2x128xf32>
    %10 = vector.shape_cast %9 : vector<2x128xf32> to vector<2x128x1xf32>
    %11 = vector.broadcast %10 : vector<2x128x1xf32> to vector<2x128x128xf32>
    %12 = arith.subf %8, %11 : vector<2x128x128xf32>
    %13 = math.exp %12 : vector<2x128x128xf32>
    %cst_9 = arith.constant dense<0.000000e+00> : vector<2x128xf32>
    %14 = vector.multi_reduction <add>, %13, %cst_9 [2] : vector<2x128x128xf32> to vector<2x128xf32>
    %15 = vector.shape_cast %14 : vector<2x128xf32> to vector<2x128x1xf32>
    %c0_10 = arith.constant 0 : index
    %c0_11 = arith.constant 0 : index
    %c0_12 = arith.constant 0 : index
    %16 = vector.load %arg4[%c0_10, %c0_11, %c0_12] : memref<2x128x128xf32, #tpu.memory_space<vmem>>, vector<2x128x128xf32>
    "tpu.trace_start"() <{level = 10 : i32, message = "hqk,hkd->hqd"}> : () -> ()
    %cst_13 = arith.constant dense<0.000000e+00> : vector<2x128x128xf32>
    %17 = tpu.matmul %13, %16, %cst_13 {dimension_numbers = #tpu.dot_dimension_numbers<[2], [1], [1], [2], [0, 0, 0, 1, 1, 2], [0], [0]>} : vector<2x128x128xf32>, vector<2x128x128xf32>, vector<2x128x128xf32> -> vector<2x128x128xf32>
    "tpu.trace_stop"() : () -> ()
    %18 = tpu.reciprocal %15 : vector<2x128x1xf32> -> vector<2x128x1xf32>
    %19 = vector.broadcast %18 : vector<2x128x1xf32> to vector<2x128x128xf32>
    %20 = arith.mulf %17, %19 : vector<2x128x128xf32>
    %c0_14 = arith.constant 0 : index
    %c0_15 = arith.constant 0 : index
    %c0_16 = arith.constant 0 : index
    %21 = vector.load %arg5[%c0_14, %c0_15, %c0_16] : memref<2x128x128xf32, #tpu.memory_space<vmem>>, vector<2x128x128xf32>
    tpu.vector_store %arg5[%c0_14, %c0_15, %c0_16], %20 {strides = array<i32>} : memref<2x128x128xf32, #tpu.memory_space<vmem>>, vector<2x128x128xf32>,
    return
  }
  func.func @transform_0(%arg0: i32) -> (i32, i32) {
    %c0_i32 = arith.constant 0 : i32
    %c0_i32_0 = arith.constant 0 : i32
    %c0_i32_1 = arith.constant 0 : i32
    return %c0_i32, %c0_i32_0 : i32, i32
  }
  func.func @transform_1(%arg0: i32) -> (i32, i32, i32) {
    %c0_i32 = arith.constant 0 : i32
    %c0_i32_0 = arith.constant 0 : i32
    %c0_i32_1 = arith.constant 0 : i32
    return %arg0, %c0_i32, %c0_i32_0 : i32, i32, i32
  }
  func.func @transform_2(%arg0: i32) -> (i32, i32, i32) {
    %c0_i32 = arith.constant 0 : i32
    %c0_i32_0 = arith.constant 0 : i32
    %c0_i32_1 = arith.constant 0 : i32
    return %arg0, %c0_i32, %c0_i32_0 : i32, i32, i32
  }
  func.func @transform_3(%arg0: i32) -> (i32, i32, i32) {
    %c0_i32 = arith.constant 0 : i32
    %c0_i32_0 = arith.constant 0 : i32
    %c0_i32_1 = arith.constant 0 : i32
    return %arg0, %c0_i32, %c0_i32_0 : i32, i32, i32
  }
  func.func @transform_4(%arg0: i32) -> (i32, i32, i32) {
    %c0_i32 = arith.constant 0 : i32
    %c0_i32_0 = arith.constant 0 : i32
    %c0_i32_1 = arith.constant 0 : i32
    return %arg0, %c0_i32, %c0_i32_0 : i32, i32, i32
  }
}

module attributes {stable_mosaic.version = 11 : i64} {
  func.func @_attn_kernel(%arg0: i32, %arg1: memref<128x128xf32, #tpu.memory_space<vmem>>, %arg2: memref<2x128x128xf32, #tpu.memory_space<vmem>>, %arg3: memref<2x128x128xf32, #tpu.memory_space<vmem>>, %arg4: memref<2x128x128xf32, #tpu.memory_space<vmem>>, %arg5: memref<2x128x128xf32, #tpu.memory_space<vmem>>) attributes {dimension_semantics = [#tpu.dimension_semantics<parallel>], iteration_bounds = array<i64: 4>, scalar_prefetch = 0 : i64, scratch_operands = 0 : i64, tpu.core_type = #tpu.core_type<tc>, window_params = [{pipeline_mode = #tpu.pipeline_mode<synchronous>, transform_indices = @transform_0, window_bounds = array<i64: 128, 128>}, {transform_indices = @transform_1, window_bounds = array<i64: 2, 128, 128>}, {transform_indices = @transform_2, window_bounds = array<i64: 2, 128, 128>}, {transform_indices = @transform_3, window_bounds = array<i64: 2, 128, 128>}, {transform_indices = @transform_4, window_bounds = array<i64: 2, 128, 128>}]} {
    %c0 = arith.constant 0 : index
    %c0_0 = arith.constant 0 : index
    %c0_1 = arith.constant 0 : index
    %0 = vector.load %arg2[%c0, %c0_0, %c0_1] : memref<2x128x128xf32, #tpu.memory_space<vmem>>, vector<2x128x128xf32>
    %c0_2 = arith.constant 0 : index
    %c0_3 = arith.constant 0 : index
    %c0_4 = arith.constant 0 : index
    %1 = vector.load %arg3[%c0_2, %c0_3, %c0_4] : memref<2x128x128xf32, #tpu.memory_space<vmem>>, vector<2x128x128xf32>
    "tpu.trace_start"() <{level = 10 : i32, message = "hqd,hkd->hqk"}> : () -> ()
    %cst = arith.constant dense<0.000000e+00> : vector<2x128x128xf32>
    %2 = tpu.matmul %0, %1, %cst {dimension_numbers = #tpu.dot_dimension_numbers<[2], [2], [1], [1], [0, 0, 0, 1, 1, 1], [0], [0]>} : vector<2x128x128xf32>, vector<2x128x128xf32>, vector<2x128x128xf32> -> vector<2x128x128xf32>
    "tpu.trace_stop"() : () -> ()
    %cst_5 = arith.constant 0.0883883461 : f32
    %3 = vector.broadcast %cst_5 : f32 to vector<2x128x128xf32>
    %4 = arith.mulf %2, %3 : vector<2x128x128xf32>
    %c0_6 = arith.constant 0 : index
    %c0_7 = arith.constant 0 : index
    %5 = vector.load %arg1[%c0_6, %c0_7] : memref<128x128xf32, #tpu.memory_space<vmem>>, vector<128x128xf32>
    %6 = vector.shape_cast %5 : vector<128x128xf32> to vector<1x128x128xf32>
    %7 = vector.broadcast %6 : vector<1x128x128xf32> to vector<2x128x128xf32>
    %8 = arith.addf %4, %7 : vector<2x128x128xf32>
    %cst_8 = arith.constant dense<0xFF800000> : vector<2x128xf32>
    %9 = vector.multi_reduction <maximumf>, %8, %cst_8 [2] : vector<2x128x128xf32> to vector<2x128xf32>
    %10 = vector.shape_cast %9 : vector<2x128xf32> to vector<2x128x1xf32>
    %11 = vector.broadcast %10 : vector<2x128x1xf32> to vector<2x128x128xf32>
    %12 = arith.subf %8, %11 : vector<2x128x128xf32>
    %13 = math.exp %12 : vector<2x128x128xf32>
    %cst_9 = arith.constant dense<0.000000e+00> : vector<2x128xf32>
    %14 = vector.multi_reduction <add>, %13, %cst_9 [2] : vector<2x128x128xf32> to vector<2x128xf32>
    %15 = vector.shape_cast %14 : vector<2x128xf32> to vector<2x128x1xf32>
    %c0_10 = arith.constant 0 : index
    %c0_11 = arith.constant 0 : index
    %c0_12 = arith.constant 0 : index
    %16 = vector.load %arg4[%c0_10, %c0_11, %c0_12] : memref<2x128x128xf32, #tpu.memory_space<vmem>>, vector<2x128x128xf32>
    "tpu.trace_start"() <{level = 10 : i32, message = "hqk,hkd->hqd"}> : () -> ()
    %cst_13 = arith.constant dense<0.000000e+00> : vector<2x128x128xf32>
    %17 = tpu.matmul %13, %16, %cst_13 {dimension_numbers = #tpu.dot_dimension_numbers<[2], [1], [1], [2], [0, 0, 0, 1, 1, 2], [0], [0]>} : vector<2x128x128xf32>, vector<2x128x128xf32>, vector<2x128x128xf32> -> vector<2x128x128xf32>
    "tpu.trace_stop"() : () -> ()
    %18 = tpu.reciprocal %15 : vector<2x128x1xf32> -> vector<2x128x1xf32>
    %19 = vector.broadcast %18 : vector<2x128x1xf32> to vector<2x128x128xf32>
    %20 = arith.mulf %17, %19 : vector<2x128x128xf32>
    %c0_14 = arith.constant 0 : index
    %c0_15 = arith.constant 0 : index
    %c0_16 = arith.constant 0 : index
    %21 = vector.load %arg5[%c0_14, %c0_15, %c0_16] : memref<2x128x128xf32, #tpu.memory_space<vmem>>, vector<2x128x128xf32>
    tpu.vector_store %arg5[%c0_14, %c0_15, %c0_16], %20 {strides = array<i32>} : memref<2x128x128xf32, #tpu.memory_space<vmem>>, vector<2x128x128xf32>,
    return
  }
  func.func @transform_0(%arg0: i32) -> (i32, i32) {
    %c0_i32 = arith.constant 0 : i32
    %c0_i32_0 = arith.constant 0 : i32
    %c0_i32_1 = arith.constant 0 : i32
    return %c0_i32, %c0_i32_0 : i32, i32
  }
  func.func @transform_1(%arg0: i32) -> (i32, i32, i32) {
    %c0_i32 = arith.constant 0 : i32
    %c0_i32_0 = arith.constant 0 : i32
    %c0_i32_1 = arith.constant 0 : i32
    return %arg0, %c0_i32, %c0_i32_0 : i32, i32, i32
  }
  func.func @transform_2(%arg0: i32) -> (i32, i32, i32) {
    %c0_i32 = arith.constant 0 : i32
    %c0_i32_0 = arith.constant 0 : i32
    %c0_i32_1 = arith.constant 0 : i32
    return %arg0, %c0_i32, %c0_i32_0 : i32, i32, i32
  }
  func.func @transform_3(%arg0: i32) -> (i32, i32, i32) {
    %c0_i32 = arith.constant 0 : i32
    %c0_i32_0 = arith.constant 0 : i32
    %c0_i32_1 = arith.constant 0 : i32
    return %arg0, %c0_i32, %c0_i32_0 : i32, i32, i32
  }
  func.func @transform_4(%arg0: i32) -> (i32, i32, i32) {
    %c0_i32 = arith.constant 0 : i32
    %c0_i32_0 = arith.constant 0 : i32
    %c0_i32_1 = arith.constant 0 : i32
    return %arg0, %c0_i32, %c0_i32_0 : i32, i32, i32
  }
}

</mosaic_0001>

<llo_original>
// kernel: tpu_custom_call.1
$region0: #{tpu_custom_call.1}
  #allocation0 [shape = 'u32[]', space=smem, size = 0x4, offset = 0x4, fixed_abs, tag = 'smem constant byte address 0x4 - core index']
  #allocation1 [shape = 'u32[144,128]{1,0:T(1,128)}', space=vmem, size = 0x12000, scoped, tag = 'internal scratch']
  %s0 = inlined_call_operand.hbm [shape: f32[128,128], index: 0, kind: input, shape index: {}]
  %s1 = inlined_call_operand.hbm [shape: f32[8,128,128], index: 1, kind: input, shape index: {}]
  %s2 = inlined_call_operand.hbm [shape: f32[8,128,128], index: 2, kind: input, shape index: {}]
  %s3 = inlined_call_operand.hbm [shape: f32[8,128,128], index: 3, kind: input, shape index: {}]
  %s4 = inlined_call_operand.hbm [shape: f32[8,128,128], index: 4, kind: output, shape index: {}]
  %s5 = sld [smem:[#allocation0]]
  $region65: #{tpu_custom_call.1} parent=0
    _
  %s7 = ssub.s32 1, %s5
  %s8 = scalar_select 0, %s7, %s5
  $region1: #{tpu_custom_call.1} parent=0
    #allocation2 [shape = 'u8[65536]{0}', space=vmem, size = 0x10000, scoped, tag = 'input window, operand 0, single buffered']
    #allocation3 [shape = 's32[2]{0}', space=sflag, size = 0x8, scoped, tag = 'scoped memory for tpu_custom_call.1']
    #allocation4 [shape = 's32[2]{0}', space=sflag, size = 0x8, scoped, tag = 'scoped memory for tpu_custom_call.1']
    #allocation5 [shape = 'u8[262144]{0}', space=vmem, size = 0x40000, scoped, tag = 'input window, operand 1']
    #allocation6 [shape = 's32[2]{0}', space=sflag, size = 0x8, scoped, tag = 'scoped memory for tpu_custom_call.1']
    #allocation7 [shape = 'u8[262144]{0}', space=vmem, size = 0x40000, scoped, tag = 'input window, operand 2']
    #allocation8 [shape = 'u8[262144]{0}', space=vmem, size = 0x40000, scoped, tag = 'input window, operand 3']
    #allocation9 [shape = 's32[2]{0}', space=sflag, size = 0x8, scoped, tag = 'scoped memory for tpu_custom_call.1']
    #allocation10 [shape = 'u8[262144]{0}', space=vmem, size = 0x40000, scoped, tag = 'output window, operand 0']
    %9 = vsyncpa [#allocation3], 0
    %10 = vsyncpa [#allocation6], 0
    %s11 = scalar_lea.sflag [#allocation6], 1
    %12 = vsyncpa %s11, 0
    %13 = vsyncpa [#allocation9], 0
    %s14 = scalar_lea.sflag [#allocation9], 1
    %15 = vsyncpa %s14, 0
    %16 = vsyncpa [#allocation4], 0
    %s17 = scalar_lea.sflag [#allocation4], 1
    %18 = vsyncpa %s17, 0
    loop: start=0, step=1, limit=6
    $region2: #{tpu_custom_call.1} parent=1 // loop_pre_header
      _
    $region3: #{tpu_custom_call.1} parent=1 // loop_header
      %s20 = sphi 0, %s24
      %p21 = scmp.ge.s32.totalorder %s20, 6
      %s28 = sphi 0, %s28
      %s30 = sphi 0, %s28
      %s31 = sphi 0, %s30
      %s45 = sphi 0, %s31
      %s51 = sphi 0, %s53
      %s54 = sphi 0, %s51
      %s55 = sphi 0, %s54
      %s71 = sphi 0, %s55
      %s77 = sphi 0, %s79
      %s80 = sphi 0, %s77
      %s81 = sphi 0, %s80
      %s97 = sphi 0, %s81
      %s103 = sphi 0, %s105
      %s106 = sphi 0, %s103
      %s107 = sphi 0, %s106
      %s123 = sphi 0, %s107
      %s129 = sphi 0, %s131
      %s132 = sphi 0, %s129
      %s133 = sphi 0, %s132
      %s149 = sphi 0, %s133
    $region4: #{tpu_custom_call.1} parent=1 // loop_header_branch
      %23 = sbr.rel (%p21) target = $region8
    $region5: #{tpu_custom_call.1} parent=1 // loop_body
      %s25 = ssub.s32 %s20, 1
      %s26 = ssub.s32 %s20, 2
      %s27 = sadd.s32 %s20, 1
      %s29 = sadd.s32 %s28, 1
      %p32 = scmp.eq.s32.totalorder %s20, 3
      %p33 = scmp.ne.s32.totalorder %s28, %s30
      %p34 = scmp.eq.s32.totalorder %s20, 0
      %p35 = por %p33, %p34
      %p36 = scmp.ne.s32.totalorder %s28, %s30
      %p37 = scmp.eq.s32.totalorder %s25, 3
      %p38 = por %p36, %p37
      %p39 = scmp.ne.s32.totalorder %s30, %s31
      %p40 = scmp.eq.s32.totalorder %s25, 0
      %p41 = por %p39, %p40
      %p42 = scmp.ne.s32.totalorder %s30, %s31
      %p43 = scmp.eq.s32.totalorder %s26, 3
      %p44 = por %p42, %p43
      %p46 = scmp.ne.s32.totalorder %s31, %s45
      %p47 = scmp.eq.s32.totalorder %s26, 0
      %p48 = por %p46, %p47
      %s49 = ssub.s32 %s20, %s27
      %p50 = scmp.eq.s32.totalorder %s49, 0
      %s52 = sadd.s32 %s51, 1
      %s53 = scalar_select %p50, %s51, %s52
      %p56 = pneg %p50
      %p57 = scmp.eq.s32.totalorder %s20, 3
      %p58 = por %p56, %p57
      %p59 = scmp.ne.s32.totalorder %s51, %s54
      %p60 = scmp.eq.s32.totalorder %s20, 0
      %p61 = por %p59, %p60
      %p62 = scmp.ne.s32.totalorder %s51, %s54
      %p63 = scmp.eq.s32.totalorder %s25, 3
      %p64 = por %p62, %p63
      %p65 = scmp.ne.s32.totalorder %s54, %s55
      %p66 = scmp.eq.s32.totalorder %s25, 0
      %p67 = por %p65, %p66
      %p68 = scmp.ne.s32.totalorder %s54, %s55
      %p69 = scmp.eq.s32.totalorder %s26, 3
      %p70 = por %p68, %p69
      %p72 = scmp.ne.s32.totalorder %s55, %s71
      %p73 = scmp.eq.s32.totalorder %s26, 0
      %p74 = por %p72, %p73
      %s75 = ssub.s32 %s20, %s27
      %p76 = scmp.eq.s32.totalorder %s75, 0
      %s78 = sadd.s32 %s77, 1
      %s79 = scalar_select %p76, %s77, %s78
      %p82 = pneg %p76
      %p83 = scmp.eq.s32.totalorder %s20, 3
      %p84 = por %p82, %p83
      %p85 = scmp.ne.s32.totalorder %s77, %s80
      %p86 = scmp.eq.s32.totalorder %s20, 0
      %p87 = por %p85, %p86
      %p88 = scmp.ne.s32.totalorder %s77, %s80
      %p89 = scmp.eq.s32.totalorder %s25, 3
      %p90 = por %p88, %p89
      %p91 = scmp.ne.s32.totalorder %s80, %s81
      %p92 = scmp.eq.s32.totalorder %s25, 0
      %p93 = por %p91, %p92
      %p94 = scmp.ne.s32.totalorder %s80, %s81
      %p95 = scmp.eq.s32.totalorder %s26, 3
      %p96 = por %p94, %p95
      %p98 = scmp.ne.s32.totalorder %s81, %s97
      %p99 = scmp.eq.s32.totalorder %s26, 0
      %p100 = por %p98, %p99
      %s101 = ssub.s32 %s20, %s27
      %p102 = scmp.eq.s32.totalorder %s101, 0
      %s104 = sadd.s32 %s103, 1
      %s105 = scalar_select %p102, %s103, %s104
      %p108 = pneg %p102
      %p109 = scmp.eq.s32.totalorder %s20, 3
      %p110 = por %p108, %p109
      %p111 = scmp.ne.s32.totalorder %s103, %s106
      %p112 = scmp.eq.s32.totalorder %s20, 0
      %p113 = por %p111, %p112
      %p114 = scmp.ne.s32.totalorder %s103, %s106
      %p115 = scmp.eq.s32.totalorder %s25, 3
      %p116 = por %p114, %p115
      %p117 = scmp.ne.s32.totalorder %s106, %s107
      %p118 = scmp.eq.s32.totalorder %s25, 0
      %p119 = por %p117, %p118
      %p120 = scmp.ne.s32.totalorder %s106, %s107
      %p121 = scmp.eq.s32.totalorder %s26, 3
      %p122 = por %p120, %p121
      %p124 = scmp.ne.s32.totalorder %s107, %s123
      %p125 = scmp.eq.s32.totalorder %s26, 0
      %p126 = por %p124, %p125
      %s127 = ssub.s32 %s20, %s27
      %p128 = scmp.eq.s32.totalorder %s127, 0
      %s130 = sadd.s32 %s129, 1
      %s131 = scalar_select %p128, %s129, %s130
      %p134 = pneg %p128
      %p135 = scmp.eq.s32.totalorder %s20, 3
      %p136 = por %p134, %p135
      %p137 = scmp.ne.s32.totalorder %s129, %s132
      %p138 = scmp.eq.s32.totalorder %s20, 0
      %p139 = por %p137, %p138
      %p140 = scmp.ne.s32.totalorder %s129, %s132
      %p141 = scmp.eq.s32.totalorder %s25, 3
      %p142 = por %p140, %p141
      %p143 = scmp.ne.s32.totalorder %s132, %s133
      %p144 = scmp.eq.s32.totalorder %s25, 0
      %p145 = por %p143, %p144
      %p146 = scmp.ne.s32.totalorder %s132, %s133
      %p147 = scmp.eq.s32.totalorder %s26, 3
      %p148 = por %p146, %p147
      %p150 = scmp.ne.s32.totalorder %s133, %s149
      %p151 = scmp.eq.s32.totalorder %s26, 0
      %p152 = por %p150, %p151
      %p153 = scmp.le.s32.totalorder 1, %s20
      %p154 = scmp.lt.s32.totalorder %s20, 5
      %p155 = pnand %p153, %p154
      %p156 = pneg %p155
      // Predicated region
      $region9: #{tpu_custom_call.1} parent=5 // pred_check
        _
      $region10: #{tpu_custom_call.1} parent=5 // pred_check_branch
        %158 = sbr.rel (%p155) target = $region12
      $region11: #{tpu_custom_call.1} parent=5 // pred_region
        %s159 = ssub.s32 %s20, 1
        // Predicated region
        $region13: #{tpu_custom_call.1} parent=11 // pred_check
          %p160 = pneg %p41
        $region14: #{tpu_custom_call.1} parent=11 // pred_check_branch
          %162 = sbr.rel (%p160) target = $region16
        $region15: #{tpu_custom_call.1} parent=11 // pred_region
          %s164 = ssub.s32 2048, 2048
          %165 = vsyncadd [#allocation3], %s164
          %s166 = sshll.u32 [#allocation2], 4
          %s167 = int_to_ptr.vmem [resolvable:$true] %s166
          %172 = dma.hbm_to_vmem [thread:$0]  %s0, 2048, %s167, [#allocation3], 128, 128, 8
        $region16: #{tpu_custom_call.1} parent=11 // pred_fallthru
          _
      $region12: #{tpu_custom_call.1} parent=5 // pred_fallthru
        _
      %p173 = scmp.lt.s32.totalorder %s20, 4
      // Predicated region
      $region17: #{tpu_custom_call.1} parent=5 // pred_check
        %p174 = pneg %p173
      $region18: #{tpu_custom_call.1} parent=5 // pred_check_branch
        %176 = sbr.rel (%p174) target = $region20
      $region19: #{tpu_custom_call.1} parent=5 // pred_region
        // Predicated region
        $region21: #{tpu_custom_call.1} parent=19 // pred_check
          %p177 = pneg %p61
        $region22: #{tpu_custom_call.1} parent=19 // pred_check_branch
          %179 = sbr.rel (%p177) target = $region24
        $region23: #{tpu_custom_call.1} parent=19 // pred_region
          %s180 = sand.u32 %s20, 1
          %s181 = scalar_lea.sflag [#allocation6], %s180
          %s182 = sand.u32 %s51, 1
          %s183 = smul.addr %s182, 256
          %s184 = scalar_lea.vmem [#allocation5], %s183
          %s185 = smul.u32 2, %s20
          %s187 = ssub.s32 4096, 4096
          %188 = vsyncadd %s181, %s187
          %s189 = smul.addr %s185, 16
          %s190 = smul.addr %s189, 128
          %s191 = scalar_lea.hbm %s1, %s190
          %s192 = sshll.u32 %s184, 4
          %s193 = int_to_ptr.vmem [resolvable:$true] %s192
          %198 = dma.hbm_to_vmem [thread:$0]  %s191, 4096, %s193, %s181, 128, 128, 8
        $region24: #{tpu_custom_call.1} parent=19 // pred_fallthru
          _
        // Predicated region
        $region25: #{tpu_custom_call.1} parent=19 // pred_check
          %p199 = pneg %p87
        $region26: #{tpu_custom_call.1} parent=19 // pred_check_branch
          %201 = sbr.rel (%p199) target = $region28
        $region27: #{tpu_custom_call.1} parent=19 // pred_region
          %s202 = sand.u32 %s20, 1
          %s203 = scalar_lea.sflag [#allocation6], %s202
          %s204 = sand.u32 %s77, 1
          %s205 = smul.addr %s204, 256
          %s206 = scalar_lea.vmem [#allocation7], %s205
          %s207 = smul.u32 2, %s20
          %s209 = ssub.s32 4096, 4096
          %210 = vsyncadd %s203, %s209
          %s211 = smul.addr %s207, 16
          %s212 = smul.addr %s211, 128
          %s213 = scalar_lea.hbm %s2, %s212
          %s214 = sshll.u32 %s206, 4
          %s215 = int_to_ptr.vmem [resolvable:$true] %s214
          %220 = dma.hbm_to_vmem [thread:$0]  %s213, 4096, %s215, %s203, 128, 128, 8
        $region28: #{tpu_custom_call.1} parent=19 // pred_fallthru
          _
        // Predicated region
        $region29: #{tpu_custom_call.1} parent=19 // pred_check
          %p221 = pneg %p113
        $region30: #{tpu_custom_call.1} parent=19 // pred_check_branch
          %223 = sbr.rel (%p221) target = $region32
        $region31: #{tpu_custom_call.1} parent=19 // pred_region
          %s224 = sand.u32 %s103, 1
          %s225 = scalar_lea.sflag [#allocation9], %s224
          %s226 = sand.u32 %s103, 1
          %s227 = smul.addr %s226, 256
          %s228 = scalar_lea.vmem [#allocation8], %s227
          %s229 = smul.u32 2, %s20
          %s231 = ssub.s32 4096, 4096
          %232 = vsyncadd %s225, %s231
          %s233 = smul.addr %s229, 16
          %s234 = smul.addr %s233, 128
          %s235 = scalar_lea.hbm %s3, %s234
          %s236 = sshll.u32 %s228, 4
          %s237 = int_to_ptr.vmem [resolvable:$true] %s236
          %242 = dma.hbm_to_vmem [thread:$0]  %s235, 4096, %s237, %s225, 128, 128, 8
        $region32: #{tpu_custom_call.1} parent=19 // pred_fallthru
          _
      $region20: #{tpu_custom_call.1} parent=5 // pred_fallthru
        _
      %p243 = scmp.le.s32.totalorder 1, %s20
      %p244 = scmp.lt.s32.totalorder %s20, 5
      %p245 = pnand %p243, %p244
      %p246 = pneg %p245
      // Predicated region
      $region33: #{tpu_custom_call.1} parent=5 // pred_check
        _
      $region34: #{tpu_custom_call.1} parent=5 // pred_check_branch
        %248 = sbr.rel (%p245) target = $region36
      $region35: #{tpu_custom_call.1} parent=5 // pred_region
        %s249 = ssub.s32 %s20, 1
        // Predicated region
        $region37: #{tpu_custom_call.1} parent=35 // pred_check
          %p250 = pneg %p41
        $region38: #{tpu_custom_call.1} parent=35 // pred_check_branch
          %252 = sbr.rel (%p250) target = $region40
        $region39: #{tpu_custom_call.1} parent=35 // pred_region
          %253 = dma.done [#allocation3], 2048
        $region40: #{tpu_custom_call.1} parent=35 // pred_fallthru
          _
        %s254 = sand.u32 %s25, 1
        %s255 = scalar_lea.sflag [#allocation6], %s254
        %s256 = sand.u32 %s54, 1
        %s257 = smul.addr %s256, 256
        %s258 = scalar_lea.vmem [#allocation5], %s257
        // Predicated region
        $region41: #{tpu_custom_call.1} parent=35 // pred_check
          %p259 = pneg %p67
        $region42: #{tpu_custom_call.1} parent=35 // pred_check_branch
          %261 = sbr.rel (%p259) target = $region44
        $region43: #{tpu_custom_call.1} parent=35 // pred_region
          %262 = dma.done %s255, 4096
        $region44: #{tpu_custom_call.1} parent=35 // pred_fallthru
          _
        %s263 = sand.u32 %s25, 1
        %s264 = scalar_lea.sflag [#allocation6], %s263
        %s265 = sand.u32 %s80, 1
        %s266 = smul.addr %s265, 256
        %s267 = scalar_lea.vmem [#allocation7], %s266
        // Predicated region
        $region45: #{tpu_custom_call.1} parent=35 // pred_check
          %p268 = pneg %p93
        $region46: #{tpu_custom_call.1} parent=35 // pred_check_branch
          %270 = sbr.rel (%p268) target = $region48
        $region47: #{tpu_custom_call.1} parent=35 // pred_region
          %271 = dma.done %s264, 4096
        $region48: #{tpu_custom_call.1} parent=35 // pred_fallthru
          _
        %s272 = sand.u32 %s106, 1
        %s273 = scalar_lea.sflag [#allocation9], %s272
        %s274 = sand.u32 %s106, 1
        %s275 = smul.addr %s274, 256
        %s276 = scalar_lea.vmem [#allocation8], %s275
        // Predicated region
        $region49: #{tpu_custom_call.1} parent=35 // pred_check
          %p277 = pneg %p119
        $region50: #{tpu_custom_call.1} parent=35 // pred_check_branch
          %279 = sbr.rel (%p277) target = $region52
        $region51: #{tpu_custom_call.1} parent=35 // pred_region
          %280 = dma.done %s273, 4096
        $region52: #{tpu_custom_call.1} parent=35 // pred_fallthru
          _
        %p281 = pneg %p41
        %p282 = pneg %p38
        %s283 = sand.u32 %s25, 1
        %s284 = scalar_lea.sflag [#allocation6], %s283
        %s285 = sand.u32 %s54, 1
        %s286 = smul.addr %s285, 256
        %s287 = scalar_lea.vmem [#allocation5], %s286
        %p288 = pneg %p67
        %p289 = pneg %p64
        %s290 = sand.u32 %s25, 1
        %s291 = scalar_lea.sflag [#allocation6], %s290
        %s292 = sand.u32 %s80, 1
        %s293 = smul.addr %s292, 256
        %s294 = scalar_lea.vmem [#allocation7], %s293
        %p295 = pneg %p93
        %p296 = pneg %p90
        %s297 = sand.u32 %s106, 1
        %s298 = scalar_lea.sflag [#allocation9], %s297
        %s299 = sand.u32 %s106, 1
        %s300 = smul.addr %s299, 256
        %s301 = scalar_lea.vmem [#allocation8], %s300
        %p302 = pneg %p119
        %p303 = pneg %p116
        %p304 = pneg %p145
        %p305 = pneg %p142
        %s306 = sand.u32 %s132, 1
        %s307 = scalar_lea.sflag [#allocation4], %s306
        %s308 = sand.u32 %s132, 1
        %s309 = smul.addr %s308, 256
        %s310 = scalar_lea.vmem [#allocation10], %s309
        %s311 = smul.u32 2, %s25
        %s312 = smul.u32 2, %s25
        %s313 = smul.u32 2, %s25
        %s314 = smul.u32 2, %s25
        %v315 = vld [vmem:[%s258] sm:$0xff]
        %v316 = vld [vmem:[%s258 + $0x8] sm:$0xff]
        %v317 = vld [vmem:[%s258 + $0x10] sm:$0xff]
        %v318 = vld [vmem:[%s258 + $0x18] sm:$0xff]
        %v319 = vld [vmem:[%s258 + $0x20] sm:$0xff]
        %v320 = vld [vmem:[%s258 + $0x28] sm:$0xff]
        %v321 = vld [vmem:[%s258 + $0x30] sm:$0xff]
        %v322 = vld [vmem:[%s258 + $0x38] sm:$0xff]
        %v323 = vld [vmem:[%s258 + $0x40] sm:$0xff]
        %v324 = vld [vmem:[%s258 + $0x48] sm:$0xff]
        %v325 = vld [vmem:[%s258 + $0x50] sm:$0xff]
        %v326 = vld [vmem:[%s258 + $0x58] sm:$0xff]
        %v327 = vld [vmem:[%s258 + $0x60] sm:$0xff]
        %v328 = vld [vmem:[%s258 + $0x68] sm:$0xff]
        %v329 = vld [vmem:[%s258 + $0x70] sm:$0xff]
        %v330 = vld [vmem:[%s258 + $0x78] sm:$0xff]
        %v331 = vld [vmem:[%s258 + $0x80] sm:$0xff]
        %v332 = vld [vmem:[%s258 + $0x88] sm:$0xff]
        %v333 = vld [vmem:[%s258 + $0x90] sm:$0xff]
        %v334 = vld [vmem:[%s258 + $0x98] sm:$0xff]
        %v335 = vld [vmem:[%s258 + $0xa0] sm:$0xff]
        %v336 = vld [vmem:[%s258 + $0xa8] sm:$0xff]
        %v337 = vld [vmem:[%s258 + $0xb0] sm:$0xff]
        %v338 = vld [vmem:[%s258 + $0xb8] sm:$0xff]
        %v339 = vld [vmem:[%s258 + $0xc0] sm:$0xff]
        %v340 = vld [vmem:[%s258 + $0xc8] sm:$0xff]
        %v341 = vld [vmem:[%s258 + $0xd0] sm:$0xff]
        %v342 = vld [vmem:[%s258 + $0xd8] sm:$0xff]
        %v343 = vld [vmem:[%s258 + $0xe0] sm:$0xff]
        %v344 = vld [vmem:[%s258 + $0xe8] sm:$0xff]
        %v345 = vld [vmem:[%s258 + $0xf0] sm:$0xff]
        %v346 = vld [vmem:[%s258 + $0xf8] sm:$0xff]
        %v347 = vld [vmem:[%s267] sm:$0xff]
        %v348 = vld [vmem:[%s267 + $0x8] sm:$0xff]
        %v349 = vld [vmem:[%s267 + $0x10] sm:$0xff]
        %v350 = vld [vmem:[%s267 + $0x18] sm:$0xff]
        %v351 = vld [vmem:[%s267 + $0x20] sm:$0xff]
        %v352 = vld [vmem:[%s267 + $0x28] sm:$0xff]
        %v353 = vld [vmem:[%s267 + $0x30] sm:$0xff]
        %v354 = vld [vmem:[%s267 + $0x38] sm:$0xff]
        %v355 = vld [vmem:[%s267 + $0x40] sm:$0xff]
        %v356 = vld [vmem:[%s267 + $0x48] sm:$0xff]
        %v357 = vld [vmem:[%s267 + $0x50] sm:$0xff]
        %v358 = vld [vmem:[%s267 + $0x58] sm:$0xff]
        %v359 = vld [vmem:[%s267 + $0x60] sm:$0xff]
        %v360 = vld [vmem:[%s267 + $0x68] sm:$0xff]
        %v361 = vld [vmem:[%s267 + $0x70] sm:$0xff]
        %v362 = vld [vmem:[%s267 + $0x78] sm:$0xff]
        %v363 = vld [vmem:[%s267 + $0x80] sm:$0xff]
        %v364 = vld [vmem:[%s267 + $0x88] sm:$0xff]
        %v365 = vld [vmem:[%s267 + $0x90] sm:$0xff]
        %v366 = vld [vmem:[%s267 + $0x98] sm:$0xff]
        %v367 = vld [vmem:[%s267 + $0xa0] sm:$0xff]
        %v368 = vld [vmem:[%s267 + $0xa8] sm:$0xff]
        %v369 = vld [vmem:[%s267 + $0xb0] sm:$0xff]
        %v370 = vld [vmem:[%s267 + $0xb8] sm:$0xff]
        %v371 = vld [vmem:[%s267 + $0xc0] sm:$0xff]
        %v372 = vld [vmem:[%s267 + $0xc8] sm:$0xff]
        %v373 = vld [vmem:[%s267 + $0xd0] sm:$0xff]
        %v374 = vld [vmem:[%s267 + $0xd8] sm:$0xff]
        %v375 = vld [vmem:[%s267 + $0xe0] sm:$0xff]
        %v376 = vld [vmem:[%s267 + $0xe8] sm:$0xff]
        %v377 = vld [vmem:[%s267 + $0xf0] sm:$0xff]
        %v378 = vld [vmem:[%s267 + $0xf8] sm:$0xff]
        %379 = vmatprep.subr.mxu0 0.0
        %380 = vmatpush1.xpose.msra.mxu0 %v362
        %381 = vmatprep.subr.mxu0 0.0
        %382 = vmatpush1.xpose.msra.mxu0 %v361
        %383 = vmatprep.subr.mxu0 0.0
        %384 = vmatpush1.xpose.msra.mxu0 %v360
        %385 = vmatprep.subr.mxu0 0.0
        %386 = vmatpush1.xpose.msra.mxu0 %v359
        %387 = vmatprep.subr.mxu0 0.0
        %388 = vmatpush1.xpose.msra.mxu0 %v358
        %389 = vmatprep.subr.mxu0 0.0
        %390 = vmatpush1.xpose.msra.mxu0 %v357
        %391 = vmatprep.subr.mxu0 0.0
        %392 = vmatpush1.xpose.msra.mxu0 %v356
        %393 = vmatprep.subr.mxu0 0.0
        %394 = vmatpush1.xpose.msra.mxu0 %v355
        %395 = vmatprep.subr.mxu0 0.0
        %396 = vmatpush1.xpose.msra.mxu0 %v354
        %397 = vmatprep.subr.mxu0 0.0
        %398 = vmatpush1.xpose.msra.mxu0 %v353
        %399 = vmatprep.subr.mxu0 0.0
        %400 = vmatpush1.xpose.msra.mxu0 %v352
        %401 = vmatprep.subr.mxu0 0.0
        %402 = vmatpush1.xpose.msra.mxu0 %v351
        %403 = vmatprep.subr.mxu0 0.0
        %404 = vmatpush1.xpose.msra.mxu0 %v350
        %405 = vmatprep.subr.mxu0 0.0
        %406 = vmatpush1.xpose.msra.mxu0 %v349
        %407 = vmatprep.subr.mxu0 0.0
        %408 = vmatpush1.xpose.msra.mxu0 %v348
        %409 = vmatprep.subr.mxu0 0.0
        %410 = vmatpush1.xpose.msra.mxu0 %v347
        %411 = vmatprep.subr.mxu0 0.0
        %412 = vmatpush2.xpose.msra.mxu0 0.0
        %413 = vmatprep.subr.mxu0 0.0
        %414 = vmatpush2.xpose.msra.mxu0 0.0
        %415 = vmatprep.subr.mxu0 0.0
        %416 = vmatpush2.xpose.msra.mxu0 0.0
        %417 = vmatprep.subr.mxu0 0.0
        %418 = vmatpush2.xpose.msra.mxu0 0.0
        %419 = vmatprep.subr.mxu0 0.0
        %420 = vmatpush2.xpose.msra.mxu0 0.0
        %421 = vmatprep.subr.mxu0 0.0
        %422 = vmatpush2.xpose.msra.mxu0 0.0
        %423 = vmatprep.subr.mxu0 0.0
        %424 = vmatpush2.xpose.msra.mxu0 0.0
        %425 = vmatprep.subr.mxu0 0.0
        %426 = vmatpush2.xpose.msra.mxu0 0.0
        %427 = vmatprep.subr.mxu0 0.0
        %428 = vmatpush2.xpose.msra.mxu0 0.0
        %429 = vmatprep.subr.mxu0 0.0
        %430 = vmatpush2.xpose.msra.mxu0 0.0
        %431 = vmatprep.subr.mxu0 0.0
        %432 = vmatpush2.xpose.msra.mxu0 0.0
        %433 = vmatprep.subr.mxu0 0.0
        %434 = vmatpush2.xpose.msra.mxu0 0.0
        %435 = vmatprep.subr.mxu0 0.0
        %436 = vmatpush2.xpose.msra.mxu0 0.0
        %437 = vmatprep.subr.mxu0 0.0
        %438 = vmatpush2.xpose.msra.mxu0 0.0
        %439 = vmatprep.subr.mxu0 0.0
        %440 = vmatpush2.xpose.msra.mxu0 0.0
        %441 = vmatprep.subr.mxu0 0.0
        %442 = vmatpush2.xpose.msra.mxu0 0.0
        %443 = vmatprep.mubr.f32.mxu0 0.0
        %444 = vmatmul.mubr.f32.gmra.mxu0 %v315
        %v445 = vpop.f32.mrf.mxu0
        %v446 = vadd.f32 0.0, %v445
        %v447 = vpop.f32.mrf.mxu0
        %448 = vmatprep.mubr.f32.mxu0 0.0
        %449 = vmatmul.mubr.f32.gmra.mxu0 %v316
        %v450 = vpop.f32.mrf.mxu0
        %v451 = vadd.f32 0.0, %v450
        %v452 = vpop.f32.mrf.mxu0
        %453 = vmatprep.mubr.f32.mxu0 0.0
        %454 = vmatmul.mubr.f32.gmra.mxu0 %v317
        %v455 = vpop.f32.mrf.mxu0
        %v456 = vadd.f32 0.0, %v455
        %v457 = vpop.f32.mrf.mxu0
        %458 = vmatprep.mubr.f32.mxu0 0.0
        %459 = vmatmul.mubr.f32.gmra.mxu0 %v318
        %v460 = vpop.f32.mrf.mxu0
        %v461 = vadd.f32 0.0, %v460
        %v462 = vpop.f32.mrf.mxu0
        %463 = vmatprep.mubr.f32.mxu0 0.0
        %464 = vmatmul.mubr.f32.gmra.mxu0 %v319
        %v465 = vpop.f32.mrf.mxu0
        %v466 = vadd.f32 0.0, %v465
        %v467 = vpop.f32.mrf.mxu0
        %468 = vmatprep.mubr.f32.mxu0 0.0
        %469 = vmatmul.mubr.f32.gmra.mxu0 %v320
        %v470 = vpop.f32.mrf.mxu0
        %v471 = vadd.f32 0.0, %v470
        %v472 = vpop.f32.mrf.mxu0
        %473 = vmatprep.mubr.f32.mxu0 0.0
        %474 = vmatmul.mubr.f32.gmra.mxu0 %v321
        %v475 = vpop.f32.mrf.mxu0
        %v476 = vadd.f32 0.0, %v475
        %v477 = vpop.f32.mrf.mxu0
        %478 = vmatprep.mubr.f32.mxu0 0.0
        %479 = vmatmul.mubr.f32.gmra.mxu0 %v322
        %v480 = vpop.f32.mrf.mxu0
        %v481 = vadd.f32 0.0, %v480
        %v482 = vpop.f32.mrf.mxu0
        %483 = vmatprep.mubr.f32.mxu0 0.0
        %484 = vmatmul.mubr.f32.gmra.mxu0 %v323
        %v485 = vpop.f32.mrf.mxu0
        %v486 = vadd.f32 0.0, %v485
        %v487 = vpop.f32.mrf.mxu0
        %488 = vmatprep.mubr.f32.mxu0 0.0
        %489 = vmatmul.mubr.f32.gmra.mxu0 %v324
        %v490 = vpop.f32.mrf.mxu0
        %v491 = vadd.f32 0.0, %v490
        %v492 = vpop.f32.mrf.mxu0
        %493 = vmatprep.mubr.f32.mxu0 0.0
        %494 = vmatmul.mubr.f32.gmra.mxu0 %v325
        %v495 = vpop.f32.mrf.mxu0
        %v496 = vadd.f32 0.0, %v495
        %v497 = vpop.f32.mrf.mxu0
        %498 = vmatprep.mubr.f32.mxu0 0.0
        %499 = vmatmul.mubr.f32.gmra.mxu0 %v326
        %v500 = vpop.f32.mrf.mxu0
        %v501 = vadd.f32 0.0, %v500
        %v502 = vpop.f32.mrf.mxu0
        %503 = vmatprep.mubr.f32.mxu0 0.0
        %504 = vmatmul.mubr.f32.gmra.mxu0 %v327
        %v505 = vpop.f32.mrf.mxu0
        %v506 = vadd.f32 0.0, %v505
        %v507 = vpop.f32.mrf.mxu0
        %508 = vmatprep.mubr.f32.mxu0 0.0
        %509 = vmatmul.mubr.f32.gmra.mxu0 %v328
        %v510 = vpop.f32.mrf.mxu0
        %v511 = vadd.f32 0.0, %v510
        %v512 = vpop.f32.mrf.mxu0
        %513 = vmatprep.mubr.f32.mxu0 0.0
        %514 = vmatmul.mubr.f32.gmra.mxu0 %v329
        %v515 = vpop.f32.mrf.mxu0
        %v516 = vadd.f32 0.0, %v515
        %v517 = vpop.f32.mrf.mxu0
        %518 = vmatprep.mubr.f32.mxu0 0.0
        %519 = vmatmul.mubr.f32.gmra.mxu0 %v330
        %v520 = vpop.f32.mrf.mxu0
        %v521 = vadd.f32 0.0, %v520
        %v522 = vpop.f32.mrf.mxu0
        %523 = vdwg.mxu0
        %524 = vmatprep.subr.mxu0 0.0
        %525 = vmatpush1.xpose.msra.mxu0 %v378
        %526 = vmatprep.subr.mxu0 0.0
        %527 = vmatpush1.xpose.msra.mxu0 %v377
        %528 = vmatprep.subr.mxu0 0.0
        %529 = vmatpush1.xpose.msra.mxu0 %v376
        %530 = vmatprep.subr.mxu0 0.0
        %531 = vmatpush1.xpose.msra.mxu0 %v375
        %532 = vmatprep.subr.mxu0 0.0
        %533 = vmatpush1.xpose.msra.mxu0 %v374
        %534 = vmatprep.subr.mxu0 0.0
        %535 = vmatpush1.xpose.msra.mxu0 %v373
        %536 = vmatprep.subr.mxu0 0.0
        %537 = vmatpush1.xpose.msra.mxu0 %v372
        %538 = vmatprep.subr.mxu0 0.0
        %539 = vmatpush1.xpose.msra.mxu0 %v371
        %540 = vmatprep.subr.mxu0 0.0
        %541 = vmatpush1.xpose.msra.mxu0 %v370
        %542 = vmatprep.subr.mxu0 0.0
        %543 = vmatpush1.xpose.msra.mxu0 %v369
        %544 = vmatprep.subr.mxu0 0.0
        %545 = vmatpush1.xpose.msra.mxu0 %v368
        %546 = vmatprep.subr.mxu0 0.0
        %547 = vmatpush1.xpose.msra.mxu0 %v367
        %548 = vmatprep.subr.mxu0 0.0
        %549 = vmatpush1.xpose.msra.mxu0 %v366
        %550 = vmatprep.subr.mxu0 0.0
        %551 = vmatpush1.xpose.msra.mxu0 %v365
        %552 = vmatprep.subr.mxu0 0.0
        %553 = vmatpush1.xpose.msra.mxu0 %v364
        %554 = vmatprep.subr.mxu0 0.0
        %555 = vmatpush1.xpose.msra.mxu0 %v363
        %556 = vmatprep.subr.mxu0 0.0
        %557 = vmatpush2.xpose.msra.mxu0 0.0
        %558 = vmatprep.subr.mxu0 0.0
        %559 = vmatpush2.xpose.msra.mxu0 0.0
        %560 = vmatprep.subr.mxu0 0.0
        %561 = vmatpush2.xpose.msra.mxu0 0.0
        %562 = vmatprep.subr.mxu0 0.0
        %563 = vmatpush2.xpose.msra.mxu0 0.0
        %564 = vmatprep.subr.mxu0 0.0
        %565 = vmatpush2.xpose.msra.mxu0 0.0
        %566 = vmatprep.subr.mxu0 0.0
        %567 = vmatpush2.xpose.msra.mxu0 0.0
        %568 = vmatprep.subr.mxu0 0.0
        %569 = vmatpush2.xpose.msra.mxu0 0.0
        %570 = vmatprep.subr.mxu0 0.0
        %571 = vmatpush2.xpose.msra.mxu0 0.0
        %572 = vmatprep.subr.mxu0 0.0
        %573 = vmatpush2.xpose.msra.mxu0 0.0
        %574 = vmatprep.subr.mxu0 0.0
        %575 = vmatpush2.xpose.msra.mxu0 0.0
        %576 = vmatprep.subr.mxu0 0.0
        %577 = vmatpush2.xpose.msra.mxu0 0.0
        %578 = vmatprep.subr.mxu0 0.0
        %579 = vmatpush2.xpose.msra.mxu0 0.0
        %580 = vmatprep.subr.mxu0 0.0
        %581 = vmatpush2.xpose.msra.mxu0 0.0
        %582 = vmatprep.subr.mxu0 0.0
        %583 = vmatpush2.xpose.msra.mxu0 0.0
        %584 = vmatprep.subr.mxu0 0.0
        %585 = vmatpush2.xpose.msra.mxu0 0.0
        %586 = vmatprep.subr.mxu0 0.0
        %587 = vmatpush2.xpose.msra.mxu0 0.0
        %588 = vmatprep.mubr.f32.mxu0 0.0
        %589 = vmatmul.mubr.f32.gmra.mxu0 %v331
        %v590 = vpop.f32.mrf.mxu0
        %v591 = vadd.f32 0.0, %v590
        %v592 = vpop.f32.mrf.mxu0
        %593 = vmatprep.mubr.f32.mxu0 0.0
        %594 = vmatmul.mubr.f32.gmra.mxu0 %v332
        %v595 = vpop.f32.mrf.mxu0
        %v596 = vadd.f32 0.0, %v595
        %v597 = vpop.f32.mrf.mxu0
        %598 = vmatprep.mubr.f32.mxu0 0.0
        %599 = vmatmul.mubr.f32.gmra.mxu0 %v333
        %v600 = vpop.f32.mrf.mxu0
        %v601 = vadd.f32 0.0, %v600
        %v602 = vpop.f32.mrf.mxu0
        %603 = vmatprep.mubr.f32.mxu0 0.0
        %604 = vmatmul.mubr.f32.gmra.mxu0 %v334
        %v605 = vpop.f32.mrf.mxu0
        %v606 = vadd.f32 0.0, %v605
        %v607 = vpop.f32.mrf.mxu0
        %608 = vmatprep.mubr.f32.mxu0 0.0
        %609 = vmatmul.mubr.f32.gmra.mxu0 %v335
        %v610 = vpop.f32.mrf.mxu0
        %v611 = vadd.f32 0.0, %v610
        %v612 = vpop.f32.mrf.mxu0
        %613 = vmatprep.mubr.f32.mxu0 0.0
        %614 = vmatmul.mubr.f32.gmra.mxu0 %v336
        %v615 = vpop.f32.mrf.mxu0
        %v616 = vadd.f32 0.0, %v615
        %v617 = vpop.f32.mrf.mxu0
        %618 = vmatprep.mubr.f32.mxu0 0.0
        %619 = vmatmul.mubr.f32.gmra.mxu0 %v337
        %v620 = vpop.f32.mrf.mxu0
        %v621 = vadd.f32 0.0, %v620
        %v622 = vpop.f32.mrf.mxu0
        %623 = vmatprep.mubr.f32.mxu0 0.0
        %624 = vmatmul.mubr.f32.gmra.mxu0 %v338
        %v625 = vpop.f32.mrf.mxu0
        %v626 = vadd.f32 0.0, %v625
        %v627 = vpop.f32.mrf.mxu0
        %628 = vmatprep.mubr.f32.mxu0 0.0
        %629 = vmatmul.mubr.f32.gmra.mxu0 %v339
        %v630 = vpop.f32.mrf.mxu0
        %v631 = vadd.f32 0.0, %v630
        %v632 = vpop.f32.mrf.mxu0
        %633 = vmatprep.mubr.f32.mxu0 0.0
        %634 = vmatmul.mubr.f32.gmra.mxu0 %v340
        %v635 = vpop.f32.mrf.mxu0
        %v636 = vadd.f32 0.0, %v635
        %v637 = vpop.f32.mrf.mxu0
        %638 = vmatprep.mubr.f32.mxu0 0.0
        %639 = vmatmul.mubr.f32.gmra.mxu0 %v341
        %v640 = vpop.f32.mrf.mxu0
        %v641 = vadd.f32 0.0, %v640
        %v642 = vpop.f32.mrf.mxu0
        %643 = vmatprep.mubr.f32.mxu0 0.0
        %644 = vmatmul.mubr.f32.gmra.mxu0 %v342
        %v645 = vpop.f32.mrf.mxu0
        %v646 = vadd.f32 0.0, %v645
        %v647 = vpop.f32.mrf.mxu0
        %648 = vmatprep.mubr.f32.mxu0 0.0
        %649 = vmatmul.mubr.f32.gmra.mxu0 %v343
        %v650 = vpop.f32.mrf.mxu0
        %v651 = vadd.f32 0.0, %v650
        %v652 = vpop.f32.mrf.mxu0
        %653 = vmatprep.mubr.f32.mxu0 0.0
        %654 = vmatmul.mubr.f32.gmra.mxu0 %v344
        %v655 = vpop.f32.mrf.mxu0
        %v656 = vadd.f32 0.0, %v655
        %v657 = vpop.f32.mrf.mxu0
        %658 = vmatprep.mubr.f32.mxu0 0.0
        %659 = vmatmul.mubr.f32.gmra.mxu0 %v345
        %v660 = vpop.f32.mrf.mxu0
        %v661 = vadd.f32 0.0, %v660
        %v662 = vpop.f32.mrf.mxu0
        %663 = vmatprep.mubr.f32.mxu0 0.0
        %664 = vmatmul.mubr.f32.gmra.mxu0 %v346
        %v665 = vpop.f32.mrf.mxu0
        %v666 = vadd.f32 0.0, %v665
        %v667 = vpop.f32.mrf.mxu0
        %668 = vdwg.mxu0
        %v669 = vmul.f32 %v446, 0.088388346
        %v670 = vmul.f32 %v451, 0.088388346
        %v671 = vmul.f32 %v456, 0.088388346
        %v672 = vmul.f32 %v461, 0.088388346
        %v673 = vmul.f32 %v466, 0.088388346
        %v674 = vmul.f32 %v471, 0.088388346
        %v675 = vmul.f32 %v476, 0.088388346
        %v676 = vmul.f32 %v481, 0.088388346
        %v677 = vmul.f32 %v486, 0.088388346
        %v678 = vmul.f32 %v491, 0.088388346
        %v679 = vmul.f32 %v496, 0.088388346
        %v680 = vmul.f32 %v501, 0.088388346
        %v681 = vmul.f32 %v506, 0.088388346
        %v682 = vmul.f32 %v511, 0.088388346
        %v683 = vmul.f32 %v516, 0.088388346
        %v684 = vmul.f32 %v521, 0.088388346
        %v685 = vmul.f32 %v591, 0.088388346
        %v686 = vmul.f32 %v596, 0.088388346
        %v687 = vmul.f32 %v601, 0.088388346
        %v688 = vmul.f32 %v606, 0.088388346
        %v689 = vmul.f32 %v611, 0.088388346
        %v690 = vmul.f32 %v616, 0.088388346
        %v691 = vmul.f32 %v621, 0.088388346
        %v692 = vmul.f32 %v626, 0.088388346
        %v693 = vmul.f32 %v631, 0.088388346
        %v694 = vmul.f32 %v636, 0.088388346
        %v695 = vmul.f32 %v641, 0.088388346
        %v696 = vmul.f32 %v646, 0.088388346
        %v697 = vmul.f32 %v651, 0.088388346
        %v698 = vmul.f32 %v656, 0.088388346
        %v699 = vmul.f32 %v661, 0.088388346
        %v700 = vmul.f32 %v666, 0.088388346
        %v701 = vld [vmem:[#allocation2] sm:$0xff]
        %v702 = vld [vmem:[#allocation2 + $0x8] sm:$0xff]
        %v703 = vld [vmem:[#allocation2 + $0x10] sm:$0xff]
        %v704 = vld [vmem:[#allocation2 + $0x18] sm:$0xff]
        %v705 = vld [vmem:[#allocation2 + $0x20] sm:$0xff]
        %v706 = vld [vmem:[#allocation2 + $0x28] sm:$0xff]
        %v707 = vld [vmem:[#allocation2 + $0x30] sm:$0xff]
        %v708 = vld [vmem:[#allocation2 + $0x38] sm:$0xff]
        %v709 = vld [vmem:[#allocation2 + $0x40] sm:$0xff]
        %v710 = vld [vmem:[#allocation2 + $0x48] sm:$0xff]
        %v711 = vld [vmem:[#allocation2 + $0x50] sm:$0xff]
        %v712 = vld [vmem:[#allocation2 + $0x58] sm:$0xff]
        %v713 = vld [vmem:[#allocation2 + $0x60] sm:$0xff]
        %v714 = vld [vmem:[#allocation2 + $0x68] sm:$0xff]
        %v715 = vld [vmem:[#allocation2 + $0x70] sm:$0xff]
        %v716 = vld [vmem:[#allocation2 + $0x78] sm:$0xff]
        %v717 = vadd.f32 %v669, %v701
        %v718 = vadd.f32 %v670, %v702
        %v719 = vadd.f32 %v671, %v703
        %v720 = vadd.f32 %v672, %v704
        %v721 = vadd.f32 %v673, %v705
        %v722 = vadd.f32 %v674, %v706
        %v723 = vadd.f32 %v675, %v707
        %v724 = vadd.f32 %v676, %v708
        %v725 = vadd.f32 %v677, %v709
        %v726 = vadd.f32 %v678, %v710
        %v727 = vadd.f32 %v679, %v711
        %v728 = vadd.f32 %v680, %v712
        %v729 = vadd.f32 %v681, %v713
        %v730 = vadd.f32 %v682, %v714
        %v731 = vadd.f32 %v683, %v715
        %v732 = vadd.f32 %v684, %v716
        %v733 = vadd.f32 %v685, %v701
        %v734 = vadd.f32 %v686, %v702
        %v735 = vadd.f32 %v687, %v703
        %v736 = vadd.f32 %v688, %v704
        %v737 = vadd.f32 %v689, %v705
        %v738 = vadd.f32 %v690, %v706
        %v739 = vadd.f32 %v691, %v707
        %v740 = vadd.f32 %v692, %v708
        %v741 = vadd.f32 %v693, %v709
        %v742 = vadd.f32 %v694, %v710
        %v743 = vadd.f32 %v695, %v711
        %v744 = vadd.f32 %v696, %v712
        %v745 = vadd.f32 %v697, %v713
        %v746 = vadd.f32 %v698, %v714
        %v747 = vadd.f32 %v699, %v715
        %v748 = vadd.f32 %v700, %v716
        %749 = vmax.xlane.f32.xlu0 %v717
        %v750 = vpop.xlane.xlu0 %749
        %751 = vmax.xlane.f32.xlu0 %v718
        %v752 = vpop.xlane.xlu0 %751
        %753 = vmax.xlane.f32.xlu0 %v719
        %v754 = vpop.xlane.xlu0 %753
        %755 = vmax.xlane.f32.xlu0 %v720
        %v756 = vpop.xlane.xlu0 %755
        %757 = vmax.xlane.f32.xlu0 %v721
        %v758 = vpop.xlane.xlu0 %757
        %759 = vmax.xlane.f32.xlu0 %v722
        %v760 = vpop.xlane.xlu0 %759
        %761 = vmax.xlane.f32.xlu0 %v723
        %v762 = vpop.xlane.xlu0 %761
        %763 = vmax.xlane.f32.xlu0 %v724
        %v764 = vpop.xlane.xlu0 %763
        %765 = vmax.xlane.f32.xlu0 %v725
        %v766 = vpop.xlane.xlu0 %765
        %767 = vmax.xlane.f32.xlu0 %v726
        %v768 = vpop.xlane.xlu0 %767
        %769 = vmax.xlane.f32.xlu0 %v727
        %v770 = vpop.xlane.xlu0 %769
        %771 = vmax.xlane.f32.xlu0 %v728
        %v772 = vpop.xlane.xlu0 %771
        %773 = vmax.xlane.f32.xlu0 %v729
        %v774 = vpop.xlane.xlu0 %773
        %775 = vmax.xlane.f32.xlu0 %v730
        %v776 = vpop.xlane.xlu0 %775
        %777 = vmax.xlane.f32.xlu0 %v731
        %v778 = vpop.xlane.xlu0 %777
        %779 = vmax.xlane.f32.xlu0 %v732
        %v780 = vpop.xlane.xlu0 %779
        %781 = vmax.xlane.f32.xlu0 %v733
        %v782 = vpop.xlane.xlu0 %781
        %783 = vmax.xlane.f32.xlu0 %v734
        %v784 = vpop.xlane.xlu0 %783
        %785 = vmax.xlane.f32.xlu0 %v735
        %v786 = vpop.xlane.xlu0 %785
        %787 = vmax.xlane.f32.xlu0 %v736
        %v788 = vpop.xlane.xlu0 %787
        %789 = vmax.xlane.f32.xlu0 %v737
        %v790 = vpop.xlane.xlu0 %789
        %791 = vmax.xlane.f32.xlu0 %v738
        %v792 = vpop.xlane.xlu0 %791
        %793 = vmax.xlane.f32.xlu0 %v739
        %v794 = vpop.xlane.xlu0 %793
        %795 = vmax.xlane.f32.xlu0 %v740
        %v796 = vpop.xlane.xlu0 %795
        %797 = vmax.xlane.f32.xlu0 %v741
        %v798 = vpop.xlane.xlu0 %797
        %799 = vmax.xlane.f32.xlu0 %v742
        %v800 = vpop.xlane.xlu0 %799
        %801 = vmax.xlane.f32.xlu0 %v743
        %v802 = vpop.xlane.xlu0 %801
        %803 = vmax.xlane.f32.xlu0 %v744
        %v804 = vpop.xlane.xlu0 %803
        %805 = vmax.xlane.f32.xlu0 %v745
        %v806 = vpop.xlane.xlu0 %805
        %807 = vmax.xlane.f32.xlu0 %v746
        %v808 = vpop.xlane.xlu0 %807
        %809 = vmax.xlane.f32.xlu0 %v747
        %v810 = vpop.xlane.xlu0 %809
        %811 = vmax.xlane.f32.xlu0 %v748
        %v812 = vpop.xlane.xlu0 %811
        %v813 = vsub.f32 %v717, %v750
        %v814 = vsub.f32 %v718, %v752
        %v815 = vsub.f32 %v719, %v754
        %v816 = vsub.f32 %v720, %v756
        %v817 = vsub.f32 %v721, %v758
        %v818 = vsub.f32 %v722, %v760
        %v819 = vsub.f32 %v723, %v762
        %v820 = vsub.f32 %v724, %v764
        %v821 = vsub.f32 %v725, %v766
        %v822 = vsub.f32 %v726, %v768
        %v823 = vsub.f32 %v727, %v770
        %v824 = vsub.f32 %v728, %v772
        %v825 = vsub.f32 %v729, %v774
        %v826 = vsub.f32 %v730, %v776
        %v827 = vsub.f32 %v731, %v778
        %v828 = vsub.f32 %v732, %v780
        %v829 = vsub.f32 %v733, %v782
        %v830 = vsub.f32 %v734, %v784
        %v831 = vsub.f32 %v735, %v786
        %v832 = vsub.f32 %v736, %v788
        %v833 = vsub.f32 %v737, %v790
        %v834 = vsub.f32 %v738, %v792
        %v835 = vsub.f32 %v739, %v794
        %v836 = vsub.f32 %v740, %v796
        %v837 = vsub.f32 %v741, %v798
        %v838 = vsub.f32 %v742, %v800
        %v839 = vsub.f32 %v743, %v802
        %v840 = vsub.f32 %v744, %v804
        %v841 = vsub.f32 %v745, %v806
        %v842 = vsub.f32 %v746, %v808
        %v843 = vsub.f32 %v747, %v810
        %v844 = vsub.f32 %v748, %v812
        %v845 = vmul.f32 %v813, 1.442695
        %v846 = vpow.pop %v845
        %v847 = vmul.f32 %v814, 1.442695
        %v848 = vpow.pop %v847
        %v849 = vmul.f32 %v815, 1.442695
        %v850 = vpow.pop %v849
        %v851 = vmul.f32 %v816, 1.442695
        %v852 = vpow.pop %v851
        %v853 = vmul.f32 %v817, 1.442695
        %v854 = vpow.pop %v853
        %v855 = vmul.f32 %v818, 1.442695
        %v856 = vpow.pop %v855
        %v857 = vmul.f32 %v819, 1.442695
        %v858 = vpow.pop %v857
        %v859 = vmul.f32 %v820, 1.442695
        %v860 = vpow.pop %v859
        %v861 = vmul.f32 %v821, 1.442695
        %v862 = vpow.pop %v861
        %v863 = vmul.f32 %v822, 1.442695
        %v864 = vpow.pop %v863
        %v865 = vmul.f32 %v823, 1.442695
        %v866 = vpow.pop %v865
        %v867 = vmul.f32 %v824, 1.442695
        %v868 = vpow.pop %v867
        %v869 = vmul.f32 %v825, 1.442695
        %v870 = vpow.pop %v869
        %v871 = vmul.f32 %v826, 1.442695
        %v872 = vpow.pop %v871
        %v873 = vmul.f32 %v827, 1.442695
        %v874 = vpow.pop %v873
        %v875 = vmul.f32 %v828, 1.442695
        %v876 = vpow.pop %v875
        %v877 = vmul.f32 %v829, 1.442695
        %v878 = vpow.pop %v877
        %v879 = vmul.f32 %v830, 1.442695
        %v880 = vpow.pop %v879
        %v881 = vmul.f32 %v831, 1.442695
        %v882 = vpow.pop %v881
        %v883 = vmul.f32 %v832, 1.442695
        %v884 = vpow.pop %v883
        %v885 = vmul.f32 %v833, 1.442695
        %v886 = vpow.pop %v885
        %v887 = vmul.f32 %v834, 1.442695
        %v888 = vpow.pop %v887
        %v889 = vmul.f32 %v835, 1.442695
        %v890 = vpow.pop %v889
        %v891 = vmul.f32 %v836, 1.442695
        %v892 = vpow.pop %v891
        %v893 = vmul.f32 %v837, 1.442695
        %v894 = vpow.pop %v893
        %v895 = vmul.f32 %v838, 1.442695
        %v896 = vpow.pop %v895
        %v897 = vmul.f32 %v839, 1.442695
        %v898 = vpow.pop %v897
        %v899 = vmul.f32 %v840, 1.442695
        %v900 = vpow.pop %v899
        %v901 = vmul.f32 %v841, 1.442695
        %v902 = vpow.pop %v901
        %v903 = vmul.f32 %v842, 1.442695
        %v904 = vpow.pop %v903
        %v905 = vmul.f32 %v843, 1.442695
        %v906 = vpow.pop %v905
        %v907 = vmul.f32 %v844, 1.442695
        %v908 = vpow.pop %v907
        %909 = vadd.xlane.f32.xlu0 %v846
        %v910 = vpop.xlane.xlu0 %909
        %911 = vadd.xlane.f32.xlu0 %v848
        %v912 = vpop.xlane.xlu0 %911
        %913 = vadd.xlane.f32.xlu0 %v850
        %v914 = vpop.xlane.xlu0 %913
        %915 = vadd.xlane.f32.xlu0 %v852
        %v916 = vpop.xlane.xlu0 %915
        %917 = vadd.xlane.f32.xlu0 %v854
        %v918 = vpop.xlane.xlu0 %917
        %919 = vadd.xlane.f32.xlu0 %v856
        %v920 = vpop.xlane.xlu0 %919
        %921 = vadd.xlane.f32.xlu0 %v858
        %v922 = vpop.xlane.xlu0 %921
        %923 = vadd.xlane.f32.xlu0 %v860
        %v924 = vpop.xlane.xlu0 %923
        %925 = vadd.xlane.f32.xlu0 %v862
        %v926 = vpop.xlane.xlu0 %925
        %927 = vadd.xlane.f32.xlu0 %v864
        %v928 = vpop.xlane.xlu0 %927
        %929 = vadd.xlane.f32.xlu0 %v866
        %v930 = vpop.xlane.xlu0 %929
        %931 = vadd.xlane.f32.xlu0 %v868
        %v932 = vpop.xlane.xlu0 %931
        %933 = vadd.xlane.f32.xlu0 %v870
        %v934 = vpop.xlane.xlu0 %933
        %935 = vadd.xlane.f32.xlu0 %v872
        %v936 = vpop.xlane.xlu0 %935
        %937 = vadd.xlane.f32.xlu0 %v874
        %v938 = vpop.xlane.xlu0 %937
        %939 = vadd.xlane.f32.xlu0 %v876
        %v940 = vpop.xlane.xlu0 %939
        %941 = vadd.xlane.f32.xlu0 %v878
        %v942 = vpop.xlane.xlu0 %941
        %943 = vadd.xlane.f32.xlu0 %v880
        %v944 = vpop.xlane.xlu0 %943
        %945 = vadd.xlane.f32.xlu0 %v882
        %v946 = vpop.xlane.xlu0 %945
        %947 = vadd.xlane.f32.xlu0 %v884
        %v948 = vpop.xlane.xlu0 %947
        %949 = vadd.xlane.f32.xlu0 %v886
        %v950 = vpop.xlane.xlu0 %949
        %951 = vadd.xlane.f32.xlu0 %v888
        %v952 = vpop.xlane.xlu0 %951
        %953 = vadd.xlane.f32.xlu0 %v890
        %v954 = vpop.xlane.xlu0 %953
        %955 = vadd.xlane.f32.xlu0 %v892
        %v956 = vpop.xlane.xlu0 %955
        %957 = vadd.xlane.f32.xlu0 %v894
        %v958 = vpop.xlane.xlu0 %957
        %959 = vadd.xlane.f32.xlu0 %v896
        %v960 = vpop.xlane.xlu0 %959
        %961 = vadd.xlane.f32.xlu0 %v898
        %v962 = vpop.xlane.xlu0 %961
        %963 = vadd.xlane.f32.xlu0 %v900
        %v964 = vpop.xlane.xlu0 %963
        %965 = vadd.xlane.f32.xlu0 %v902
        %v966 = vpop.xlane.xlu0 %965
        %967 = vadd.xlane.f32.xlu0 %v904
        %v968 = vpop.xlane.xlu0 %967
        %969 = vadd.xlane.f32.xlu0 %v906
        %v970 = vpop.xlane.xlu0 %969
        %971 = vadd.xlane.f32.xlu0 %v908
        %v972 = vpop.xlane.xlu0 %971
        %v973 = vld [vmem:[%s276] sm:$0xff]
        %v974 = vld [vmem:[%s276 + $0x8] sm:$0xff]
        %v975 = vld [vmem:[%s276 + $0x10] sm:$0xff]
        %v976 = vld [vmem:[%s276 + $0x18] sm:$0xff]
        %v977 = vld [vmem:[%s276 + $0x20] sm:$0xff]
        %v978 = vld [vmem:[%s276 + $0x28] sm:$0xff]
        %v979 = vld [vmem:[%s276 + $0x30] sm:$0xff]
        %v980 = vld [vmem:[%s276 + $0x38] sm:$0xff]
        %v981 = vld [vmem:[%s276 + $0x40] sm:$0xff]
        %v982 = vld [vmem:[%s276 + $0x48] sm:$0xff]
        %v983 = vld [vmem:[%s276 + $0x50] sm:$0xff]
        %v984 = vld [vmem:[%s276 + $0x58] sm:$0xff]
        %v985 = vld [vmem:[%s276 + $0x60] sm:$0xff]
        %v986 = vld [vmem:[%s276 + $0x68] sm:$0xff]
        %v987 = vld [vmem:[%s276 + $0x70] sm:$0xff]
        %v988 = vld [vmem:[%s276 + $0x78] sm:$0xff]
        %v989 = vld [vmem:[%s276 + $0x80] sm:$0xff]
        %v990 = vld [vmem:[%s276 + $0x88] sm:$0xff]
        %v991 = vld [vmem:[%s276 + $0x90] sm:$0xff]
        %v992 = vld [vmem:[%s276 + $0x98] sm:$0xff]
        %v993 = vld [vmem:[%s276 + $0xa0] sm:$0xff]
        %v994 = vld [vmem:[%s276 + $0xa8] sm:$0xff]
        %v995 = vld [vmem:[%s276 + $0xb0] sm:$0xff]
        %v996 = vld [vmem:[%s276 + $0xb8] sm:$0xff]
        %v997 = vld [vmem:[%s276 + $0xc0] sm:$0xff]
        %v998 = vld [vmem:[%s276 + $0xc8] sm:$0xff]
        %v999 = vld [vmem:[%s276 + $0xd0] sm:$0xff]
        %v1000 = vld [vmem:[%s276 + $0xd8] sm:$0xff]
        %v1001 = vld [vmem:[%s276 + $0xe0] sm:$0xff]
        %v1002 = vld [vmem:[%s276 + $0xe8] sm:$0xff]
        %v1003 = vld [vmem:[%s276 + $0xf0] sm:$0xff]
        %v1004 = vld [vmem:[%s276 + $0xf8] sm:$0xff]
        %1005 = vmatprep.subr.mxu0 0.0
        %1006 = vmatpush1.msra.mxu0 %v988
        %1007 = vmatprep.subr.mxu0 0.0
        %1008 = vmatpush1.msra.mxu0 %v987
        %1009 = vmatprep.subr.mxu0 0.0
        %1010 = vmatpush1.msra.mxu0 %v986
        %1011 = vmatprep.subr.mxu0 0.0
        %1012 = vmatpush1.msra.mxu0 %v985
        %1013 = vmatprep.subr.mxu0 0.0
        %1014 = vmatpush1.msra.mxu0 %v984
        %1015 = vmatprep.subr.mxu0 0.0
        %1016 = vmatpush1.msra.mxu0 %v983
        %1017 = vmatprep.subr.mxu0 0.0
        %1018 = vmatpush1.msra.mxu0 %v982
        %1019 = vmatprep.subr.mxu0 0.0
        %1020 = vmatpush1.msra.mxu0 %v981
        %1021 = vmatprep.subr.mxu0 0.0
        %1022 = vmatpush1.msra.mxu0 %v980
        %1023 = vmatprep.subr.mxu0 0.0
        %1024 = vmatpush1.msra.mxu0 %v979
        %1025 = vmatprep.subr.mxu0 0.0
        %1026 = vmatpush1.msra.mxu0 %v978
        %1027 = vmatprep.subr.mxu0 0.0
        %1028 = vmatpush1.msra.mxu0 %v977
        %1029 = vmatprep.subr.mxu0 0.0
        %1030 = vmatpush1.msra.mxu0 %v976
        %1031 = vmatprep.subr.mxu0 0.0
        %1032 = vmatpush1.msra.mxu0 %v975
        %1033 = vmatprep.subr.mxu0 0.0
        %1034 = vmatpush1.msra.mxu0 %v974
        %1035 = vmatprep.subr.mxu0 0.0
        %1036 = vmatpush1.msra.mxu0 %v973
        %1037 = vmatprep.subr.mxu0 0.0
        %1038 = vmatpush2.msra.mxu0 0.0
        %1039 = vmatprep.subr.mxu0 0.0
        %1040 = vmatpush2.msra.mxu0 0.0
        %1041 = vmatprep.subr.mxu0 0.0
        %1042 = vmatpush2.msra.mxu0 0.0
        %1043 = vmatprep.subr.mxu0 0.0
        %1044 = vmatpush2.msra.mxu0 0.0
        %1045 = vmatprep.subr.mxu0 0.0
        %1046 = vmatpush2.msra.mxu0 0.0
        %1047 = vmatprep.subr.mxu0 0.0
        %1048 = vmatpush2.msra.mxu0 0.0
        %1049 = vmatprep.subr.mxu0 0.0
        %1050 = vmatpush2.msra.mxu0 0.0
        %1051 = vmatprep.subr.mxu0 0.0
        %1052 = vmatpush2.msra.mxu0 0.0
        %1053 = vmatprep.subr.mxu0 0.0
        %1054 = vmatpush2.msra.mxu0 0.0
        %1055 = vmatprep.subr.mxu0 0.0
        %1056 = vmatpush2.msra.mxu0 0.0
        %1057 = vmatprep.subr.mxu0 0.0
        %1058 = vmatpush2.msra.mxu0 0.0
        %1059 = vmatprep.subr.mxu0 0.0
        %1060 = vmatpush2.msra.mxu0 0.0
        %1061 = vmatprep.subr.mxu0 0.0
        %1062 = vmatpush2.msra.mxu0 0.0
        %1063 = vmatprep.subr.mxu0 0.0
        %1064 = vmatpush2.msra.mxu0 0.0
        %1065 = vmatprep.subr.mxu0 0.0
        %1066 = vmatpush2.msra.mxu0 0.0
        %1067 = vmatprep.subr.mxu0 0.0
        %1068 = vmatpush2.msra.mxu0 0.0
        %1069 = vmatprep.mubr.f32.mxu0 0.0
        %1070 = vmatmul.mubr.f32.gmra.mxu0 %v846
        %v1071 = vpop.f32.mrf.mxu0
        %v1072 = vadd.f32 0.0, %v1071
        %v1073 = vpop.f32.mrf.mxu0
        %1074 = vmatprep.mubr.f32.mxu0 0.0
        %1075 = vmatmul.mubr.f32.gmra.mxu0 %v848
        %v1076 = vpop.f32.mrf.mxu0
        %v1077 = vadd.f32 0.0, %v1076
        %v1078 = vpop.f32.mrf.mxu0
        %1079 = vmatprep.mubr.f32.mxu0 0.0
        %1080 = vmatmul.mubr.f32.gmra.mxu0 %v850
        %v1081 = vpop.f32.mrf.mxu0
        %v1082 = vadd.f32 0.0, %v1081
        %v1083 = vpop.f32.mrf.mxu0
        %1084 = vmatprep.mubr.f32.mxu0 0.0
        %1085 = vmatmul.mubr.f32.gmra.mxu0 %v852
        %v1086 = vpop.f32.mrf.mxu0
        %v1087 = vadd.f32 0.0, %v1086
        %v1088 = vpop.f32.mrf.mxu0
        %1089 = vmatprep.mubr.f32.mxu0 0.0
        %1090 = vmatmul.mubr.f32.gmra.mxu0 %v854
        %v1091 = vpop.f32.mrf.mxu0
        %v1092 = vadd.f32 0.0, %v1091
        %v1093 = vpop.f32.mrf.mxu0
        %1094 = vmatprep.mubr.f32.mxu0 0.0
        %1095 = vmatmul.mubr.f32.gmra.mxu0 %v856
        %v1096 = vpop.f32.mrf.mxu0
        %v1097 = vadd.f32 0.0, %v1096
        %v1098 = vpop.f32.mrf.mxu0
        %1099 = vmatprep.mubr.f32.mxu0 0.0
        %1100 = vmatmul.mubr.f32.gmra.mxu0 %v858
        %v1101 = vpop.f32.mrf.mxu0
        %v1102 = vadd.f32 0.0, %v1101
        %v1103 = vpop.f32.mrf.mxu0
        %1104 = vmatprep.mubr.f32.mxu0 0.0
        %1105 = vmatmul.mubr.f32.gmra.mxu0 %v860
        %v1106 = vpop.f32.mrf.mxu0
        %v1107 = vadd.f32 0.0, %v1106
        %v1108 = vpop.f32.mrf.mxu0
        %1109 = vmatprep.mubr.f32.mxu0 0.0
        %1110 = vmatmul.mubr.f32.gmra.mxu0 %v862
        %v1111 = vpop.f32.mrf.mxu0
        %v1112 = vadd.f32 0.0, %v1111
        %v1113 = vpop.f32.mrf.mxu0
        %1114 = vmatprep.mubr.f32.mxu0 0.0
        %1115 = vmatmul.mubr.f32.gmra.mxu0 %v864
        %v1116 = vpop.f32.mrf.mxu0
        %v1117 = vadd.f32 0.0, %v1116
        %v1118 = vpop.f32.mrf.mxu0
        %1119 = vmatprep.mubr.f32.mxu0 0.0
        %1120 = vmatmul.mubr.f32.gmra.mxu0 %v866
        %v1121 = vpop.f32.mrf.mxu0
        %v1122 = vadd.f32 0.0, %v1121
        %v1123 = vpop.f32.mrf.mxu0
        %1124 = vmatprep.mubr.f32.mxu0 0.0
        %1125 = vmatmul.mubr.f32.gmra.mxu0 %v868
        %v1126 = vpop.f32.mrf.mxu0
        %v1127 = vadd.f32 0.0, %v1126
        %v1128 = vpop.f32.mrf.mxu0
        %1129 = vmatprep.mubr.f32.mxu0 0.0
        %1130 = vmatmul.mubr.f32.gmra.mxu0 %v870
        %v1131 = vpop.f32.mrf.mxu0
        %v1132 = vadd.f32 0.0, %v1131
        %v1133 = vpop.f32.mrf.mxu0
        %1134 = vmatprep.mubr.f32.mxu0 0.0
        %1135 = vmatmul.mubr.f32.gmra.mxu0 %v872
        %v1136 = vpop.f32.mrf.mxu0
        %v1137 = vadd.f32 0.0, %v1136
        %v1138 = vpop.f32.mrf.mxu0
        %1139 = vmatprep.mubr.f32.mxu0 0.0
        %1140 = vmatmul.mubr.f32.gmra.mxu0 %v874
        %v1141 = vpop.f32.mrf.mxu0
        %v1142 = vadd.f32 0.0, %v1141
        %v1143 = vpop.f32.mrf.mxu0
        %1144 = vmatprep.mubr.f32.mxu0 0.0
        %1145 = vmatmul.mubr.f32.gmra.mxu0 %v876
        %v1146 = vpop.f32.mrf.mxu0
        %v1147 = vadd.f32 0.0, %v1146
        %v1148 = vpop.f32.mrf.mxu0
        %1149 = vdwg.mxu0
        %1150 = vmatprep.subr.mxu0 0.0
        %1151 = vmatpush1.msra.mxu0 %v1004
        %1152 = vmatprep.subr.mxu0 0.0
        %1153 = vmatpush1.msra.mxu0 %v1003
        %1154 = vmatprep.subr.mxu0 0.0
        %1155 = vmatpush1.msra.mxu0 %v1002
        %1156 = vmatprep.subr.mxu0 0.0
        %1157 = vmatpush1.msra.mxu0 %v1001
        %1158 = vmatprep.subr.mxu0 0.0
        %1159 = vmatpush1.msra.mxu0 %v1000
        %1160 = vmatprep.subr.mxu0 0.0
        %1161 = vmatpush1.msra.mxu0 %v999
        %1162 = vmatprep.subr.mxu0 0.0
        %1163 = vmatpush1.msra.mxu0 %v998
        %1164 = vmatprep.subr.mxu0 0.0
        %1165 = vmatpush1.msra.mxu0 %v997
        %1166 = vmatprep.subr.mxu0 0.0
        %1167 = vmatpush1.msra.mxu0 %v996
        %1168 = vmatprep.subr.mxu0 0.0
        %1169 = vmatpush1.msra.mxu0 %v995
        %1170 = vmatprep.subr.mxu0 0.0
        %1171 = vmatpush1.msra.mxu0 %v994
        %1172 = vmatprep.subr.mxu0 0.0
        %1173 = vmatpush1.msra.mxu0 %v993
        %1174 = vmatprep.subr.mxu0 0.0
        %1175 = vmatpush1.msra.mxu0 %v992
        %1176 = vmatprep.subr.mxu0 0.0
        %1177 = vmatpush1.msra.mxu0 %v991
        %1178 = vmatprep.subr.mxu0 0.0
        %1179 = vmatpush1.msra.mxu0 %v990
        %1180 = vmatprep.subr.mxu0 0.0
        %1181 = vmatpush1.msra.mxu0 %v989
        %1182 = vmatprep.subr.mxu0 0.0
        %1183 = vmatpush2.msra.mxu0 0.0
        %1184 = vmatprep.subr.mxu0 0.0
        %1185 = vmatpush2.msra.mxu0 0.0
        %1186 = vmatprep.subr.mxu0 0.0
        %1187 = vmatpush2.msra.mxu0 0.0
        %1188 = vmatprep.subr.mxu0 0.0
        %1189 = vmatpush2.msra.mxu0 0.0
        %1190 = vmatprep.subr.mxu0 0.0
        %1191 = vmatpush2.msra.mxu0 0.0
        %1192 = vmatprep.subr.mxu0 0.0
        %1193 = vmatpush2.msra.mxu0 0.0
        %1194 = vmatprep.subr.mxu0 0.0
        %1195 = vmatpush2.msra.mxu0 0.0
        %1196 = vmatprep.subr.mxu0 0.0
        %1197 = vmatpush2.msra.mxu0 0.0
        %1198 = vmatprep.subr.mxu0 0.0
        %1199 = vmatpush2.msra.mxu0 0.0
        %1200 = vmatprep.subr.mxu0 0.0
        %1201 = vmatpush2.msra.mxu0 0.0
        %1202 = vmatprep.subr.mxu0 0.0
        %1203 = vmatpush2.msra.mxu0 0.0
        %1204 = vmatprep.subr.mxu0 0.0
        %1205 = vmatpush2.msra.mxu0 0.0
        %1206 = vmatprep.subr.mxu0 0.0
        %1207 = vmatpush2.msra.mxu0 0.0
        %1208 = vmatprep.subr.mxu0 0.0
        %1209 = vmatpush2.msra.mxu0 0.0
        %1210 = vmatprep.subr.mxu0 0.0
        %1211 = vmatpush2.msra.mxu0 0.0
        %1212 = vmatprep.subr.mxu0 0.0
        %1213 = vmatpush2.msra.mxu0 0.0
        %1214 = vmatprep.mubr.f32.mxu0 0.0
        %1215 = vmatmul.mubr.f32.gmra.mxu0 %v878
        %v1216 = vpop.f32.mrf.mxu0
        %v1217 = vadd.f32 0.0, %v1216
        %v1218 = vpop.f32.mrf.mxu0
        %1219 = vmatprep.mubr.f32.mxu0 0.0
        %1220 = vmatmul.mubr.f32.gmra.mxu0 %v880
        %v1221 = vpop.f32.mrf.mxu0
        %v1222 = vadd.f32 0.0, %v1221
        %v1223 = vpop.f32.mrf.mxu0
        %1224 = vmatprep.mubr.f32.mxu0 0.0
        %1225 = vmatmul.mubr.f32.gmra.mxu0 %v882
        %v1226 = vpop.f32.mrf.mxu0
        %v1227 = vadd.f32 0.0, %v1226
        %v1228 = vpop.f32.mrf.mxu0
        %1229 = vmatprep.mubr.f32.mxu0 0.0
        %1230 = vmatmul.mubr.f32.gmra.mxu0 %v884
        %v1231 = vpop.f32.mrf.mxu0
        %v1232 = vadd.f32 0.0, %v1231
        %v1233 = vpop.f32.mrf.mxu0
        %1234 = vmatprep.mubr.f32.mxu0 0.0
        %1235 = vmatmul.mubr.f32.gmra.mxu0 %v886
        %v1236 = vpop.f32.mrf.mxu0
        %v1237 = vadd.f32 0.0, %v1236
        %v1238 = vpop.f32.mrf.mxu0
        %1239 = vmatprep.mubr.f32.mxu0 0.0
        %1240 = vmatmul.mubr.f32.gmra.mxu0 %v888
        %v1241 = vpop.f32.mrf.mxu0
        %v1242 = vadd.f32 0.0, %v1241
        %v1243 = vpop.f32.mrf.mxu0
        %1244 = vmatprep.mubr.f32.mxu0 0.0
        %1245 = vmatmul.mubr.f32.gmra.mxu0 %v890
        %v1246 = vpop.f32.mrf.mxu0
        %v1247 = vadd.f32 0.0, %v1246
        %v1248 = vpop.f32.mrf.mxu0
        %1249 = vmatprep.mubr.f32.mxu0 0.0
        %1250 = vmatmul.mubr.f32.gmra.mxu0 %v892
        %v1251 = vpop.f32.mrf.mxu0
        %v1252 = vadd.f32 0.0, %v1251
        %v1253 = vpop.f32.mrf.mxu0
        %1254 = vmatprep.mubr.f32.mxu0 0.0
        %1255 = vmatmul.mubr.f32.gmra.mxu0 %v894
        %v1256 = vpop.f32.mrf.mxu0
        %v1257 = vadd.f32 0.0, %v1256
        %v1258 = vpop.f32.mrf.mxu0
        %1259 = vmatprep.mubr.f32.mxu0 0.0
        %1260 = vmatmul.mubr.f32.gmra.mxu0 %v896
        %v1261 = vpop.f32.mrf.mxu0
        %v1262 = vadd.f32 0.0, %v1261
        %v1263 = vpop.f32.mrf.mxu0
        %1264 = vmatprep.mubr.f32.mxu0 0.0
        %1265 = vmatmul.mubr.f32.gmra.mxu0 %v898
        %v1266 = vpop.f32.mrf.mxu0
        %v1267 = vadd.f32 0.0, %v1266
        %v1268 = vpop.f32.mrf.mxu0
        %1269 = vmatprep.mubr.f32.mxu0 0.0
        %1270 = vmatmul.mubr.f32.gmra.mxu0 %v900
        %v1271 = vpop.f32.mrf.mxu0
        %v1272 = vadd.f32 0.0, %v1271
        %v1273 = vpop.f32.mrf.mxu0
        %1274 = vmatprep.mubr.f32.mxu0 0.0
        %1275 = vmatmul.mubr.f32.gmra.mxu0 %v902
        %v1276 = vpop.f32.mrf.mxu0
        %v1277 = vadd.f32 0.0, %v1276
        %v1278 = vpop.f32.mrf.mxu0
        %1279 = vmatprep.mubr.f32.mxu0 0.0
        %1280 = vmatmul.mubr.f32.gmra.mxu0 %v904
        %v1281 = vpop.f32.mrf.mxu0
        %v1282 = vadd.f32 0.0, %v1281
        %v1283 = vpop.f32.mrf.mxu0
        %1284 = vmatprep.mubr.f32.mxu0 0.0
        %1285 = vmatmul.mubr.f32.gmra.mxu0 %v906
        %v1286 = vpop.f32.mrf.mxu0
        %v1287 = vadd.f32 0.0, %v1286
        %v1288 = vpop.f32.mrf.mxu0
        %1289 = vmatprep.mubr.f32.mxu0 0.0
        %1290 = vmatmul.mubr.f32.gmra.mxu0 %v908
        %v1291 = vpop.f32.mrf.mxu0
        %v1292 = vadd.f32 0.0, %v1291
        %v1293 = vpop.f32.mrf.mxu0
        %1294 = vdwg.mxu0
        %v1295 = vrcp.pop %v910
        %v1296 = vrcp.pop %v912
        %v1297 = vrcp.pop %v914
        %v1298 = vrcp.pop %v916
        %v1299 = vrcp.pop %v918
        %v1300 = vrcp.pop %v920
        %v1301 = vrcp.pop %v922
        %v1302 = vrcp.pop %v924
        %v1303 = vrcp.pop %v926
        %v1304 = vrcp.pop %v928
        %v1305 = vrcp.pop %v930
        %v1306 = vrcp.pop %v932
        %v1307 = vrcp.pop %v934
        %v1308 = vrcp.pop %v936
        %v1309 = vrcp.pop %v938
        %v1310 = vrcp.pop %v940
        %v1311 = vrcp.pop %v942
        %v1312 = vrcp.pop %v944
        %v1313 = vrcp.pop %v946
        %v1314 = vrcp.pop %v948
        %v1315 = vrcp.pop %v950
        %v1316 = vrcp.pop %v952
        %v1317 = vrcp.pop %v954
        %v1318 = vrcp.pop %v956
        %v1319 = vrcp.pop %v958
        %v1320 = vrcp.pop %v960
        %v1321 = vrcp.pop %v962
        %v1322 = vrcp.pop %v964
        %v1323 = vrcp.pop %v966
        %v1324 = vrcp.pop %v968
        %v1325 = vrcp.pop %v970
        %v1326 = vrcp.pop %v972
        %v1327 = vmul.f32 %v1072, %v1295
        %v1328 = vmul.f32 %v1077, %v1296
        %v1329 = vmul.f32 %v1082, %v1297
        %v1330 = vmul.f32 %v1087, %v1298
        %v1331 = vmul.f32 %v1092, %v1299
        %v1332 = vmul.f32 %v1097, %v1300
        %v1333 = vmul.f32 %v1102, %v1301
        %v1334 = vmul.f32 %v1107, %v1302
        %v1335 = vmul.f32 %v1112, %v1303
        %v1336 = vmul.f32 %v1117, %v1304
        %v1337 = vmul.f32 %v1122, %v1305
        %v1338 = vmul.f32 %v1127, %v1306
        %v1339 = vmul.f32 %v1132, %v1307
        %v1340 = vmul.f32 %v1137, %v1308
        %v1341 = vmul.f32 %v1142, %v1309
        %v1342 = vmul.f32 %v1147, %v1310
        %v1343 = vmul.f32 %v1217, %v1311
        %v1344 = vmul.f32 %v1222, %v1312
        %v1345 = vmul.f32 %v1227, %v1313
        %v1346 = vmul.f32 %v1232, %v1314
        %v1347 = vmul.f32 %v1237, %v1315
        %v1348 = vmul.f32 %v1242, %v1316
        %v1349 = vmul.f32 %v1247, %v1317
        %v1350 = vmul.f32 %v1252, %v1318
        %v1351 = vmul.f32 %v1257, %v1319
        %v1352 = vmul.f32 %v1262, %v1320
        %v1353 = vmul.f32 %v1267, %v1321
        %v1354 = vmul.f32 %v1272, %v1322
        %v1355 = vmul.f32 %v1277, %v1323
        %v1356 = vmul.f32 %v1282, %v1324
        %v1357 = vmul.f32 %v1287, %v1325
        %v1358 = vmul.f32 %v1292, %v1326
        %1359 = vst [vmem:[%s310] sm:$0xff] %v1327
        %1360 = vst [vmem:[%s310 + $0x8] sm:$0xff] %v1328
        %1361 = vst [vmem:[%s310 + $0x10] sm:$0xff] %v1329
        %1362 = vst [vmem:[%s310 + $0x18] sm:$0xff] %v1330
        %1363 = vst [vmem:[%s310 + $0x20] sm:$0xff] %v1331
        %1364 = vst [vmem:[%s310 + $0x28] sm:$0xff] %v1332
        %1365 = vst [vmem:[%s310 + $0x30] sm:$0xff] %v1333
        %1366 = vst [vmem:[%s310 + $0x38] sm:$0xff] %v1334
        %1367 = vst [vmem:[%s310 + $0x40] sm:$0xff] %v1335
        %1368 = vst [vmem:[%s310 + $0x48] sm:$0xff] %v1336
        %1369 = vst [vmem:[%s310 + $0x50] sm:$0xff] %v1337
        %1370 = vst [vmem:[%s310 + $0x58] sm:$0xff] %v1338
        %1371 = vst [vmem:[%s310 + $0x60] sm:$0xff] %v1339
        %1372 = vst [vmem:[%s310 + $0x68] sm:$0xff] %v1340
        %1373 = vst [vmem:[%s310 + $0x70] sm:$0xff] %v1341
        %1374 = vst [vmem:[%s310 + $0x78] sm:$0xff] %v1342
        %1375 = vst [vmem:[%s310 + $0x80] sm:$0xff] %v1343
        %1376 = vst [vmem:[%s310 + $0x88] sm:$0xff] %v1344
        %1377 = vst [vmem:[%s310 + $0x90] sm:$0xff] %v1345
        %1378 = vst [vmem:[%s310 + $0x98] sm:$0xff] %v1346
        %1379 = vst [vmem:[%s310 + $0xa0] sm:$0xff] %v1347
        %1380 = vst [vmem:[%s310 + $0xa8] sm:$0xff] %v1348
        %1381 = vst [vmem:[%s310 + $0xb0] sm:$0xff] %v1349
        %1382 = vst [vmem:[%s310 + $0xb8] sm:$0xff] %v1350
        %1383 = vst [vmem:[%s310 + $0xc0] sm:$0xff] %v1351
        %1384 = vst [vmem:[%s310 + $0xc8] sm:$0xff] %v1352
        %1385 = vst [vmem:[%s310 + $0xd0] sm:$0xff] %v1353
        %1386 = vst [vmem:[%s310 + $0xd8] sm:$0xff] %v1354
        %1387 = vst [vmem:[%s310 + $0xe0] sm:$0xff] %v1355
        %1388 = vst [vmem:[%s310 + $0xe8] sm:$0xff] %v1356
        %1389 = vst [vmem:[%s310 + $0xf0] sm:$0xff] %v1357
        %1390 = vst [vmem:[%s310 + $0xf8] sm:$0xff] %v1358
        %s1391 = sand.u32 %s132, 1
        %s1392 = scalar_lea.sflag [#allocation4], %s1391
        %s1393 = sand.u32 %s132, 1
        %s1394 = smul.addr %s1393, 256
        %s1395 = scalar_lea.vmem [#allocation10], %s1394
        // Predicated region
        $region53: #{tpu_custom_call.1} parent=35 // pred_check
          %p1396 = pneg %p142
        $region54: #{tpu_custom_call.1} parent=35 // pred_check_branch
          %1398 = sbr.rel (%p1396) target = $region56
        $region55: #{tpu_custom_call.1} parent=35 // pred_region
          %s1399 = smul.u32 2, %s25
          %s1401 = ssub.s32 4096, 4096
          %1402 = vsyncadd %s1392, %s1401
          %s1403 = smul.addr %s1399, 16
          %s1404 = smul.addr %s1403, 128
          %s1405 = scalar_lea.hbm %s4, %s1404
          %s1406 = sshll.u32 %s1395, 4
          %s1407 = int_to_ptr.vmem [resolvable:$true] %s1406
          %1412 = dma.vmem_to_hbm [thread:$0]  %s1407, 4096, %s1405, %s1392, 128, 128, 8
        $region56: #{tpu_custom_call.1} parent=35 // pred_fallthru
          _
      $region36: #{tpu_custom_call.1} parent=5 // pred_fallthru
        _
      %p1413 = scmp.le.s32.totalorder 2, %s20
      // Predicated region
      $region57: #{tpu_custom_call.1} parent=5 // pred_check
        %p1414 = pneg %p1413
      $region58: #{tpu_custom_call.1} parent=5 // pred_check_branch
        %1416 = sbr.rel (%p1414) target = $region60
      $region59: #{tpu_custom_call.1} parent=5 // pred_region
        %s1417 = ssub.s32 %s20, 2
        // Predicated region
        $region61: #{tpu_custom_call.1} parent=59 // pred_check
          %p1418 = pneg %p148
        $region62: #{tpu_custom_call.1} parent=59 // pred_check_branch
          %1420 = sbr.rel (%p1418) target = $region64
        $region63: #{tpu_custom_call.1} parent=59 // pred_region
          %s1421 = sand.u32 %s133, 1
          %s1422 = scalar_lea.sflag [#allocation4], %s1421
          %s1423 = sand.u32 %s133, 1
          %s1424 = smul.addr %s1423, 256
          %s1425 = scalar_lea.vmem [#allocation10], %s1424
          %1426 = dma.done %s1422, 4096
        $region64: #{tpu_custom_call.1} parent=59 // pred_fallthru
          _
      $region60: #{tpu_custom_call.1} parent=5 // pred_fallthru
        _
    $region6: #{tpu_custom_call.1} parent=1 // loop_footer
      %s24 = sadd.s32 1, %s20
    $region7: #{tpu_custom_call.1} parent=1 // loop_footer_branch
      %19 = sbr.rel target = $region3
    $region8: #{tpu_custom_call.1} parent=1 // loop_exit
      _
    %1427 = vsyncpa [#allocation3], 1
    %s1428 = scalar_lea.sflag [#allocation3], 1
    %1429 = vsyncpa %s1428, 1
    %1430 = vsyncpa [#allocation6], 1
    %s1431 = scalar_lea.sflag [#allocation6], 1
    %1432 = vsyncpa %s1431, 1
    %1433 = vsyncpa [#allocation9], 1
    %s1434 = scalar_lea.sflag [#allocation9], 1
    %1435 = vsyncpa %s1434, 1
    %1436 = vsyncpa [#allocation4], 1
    %s1437 = scalar_lea.sflag [#allocation4], 1
    %1438 = vsyncpa %s1437, 1

// kernel: tpu_custom_call.1
$region0: #{tpu_custom_call.1}
  #allocation0 [shape = 'u32[]', space=smem, size = 0x4, offset = 0x4, fixed_abs, tag = 'smem constant byte address 0x4 - core index']
  #allocation1 [shape = 'u32[144,128]{1,0:T(1,128)}', space=vmem, size = 0x12000, scoped, tag = 'internal scratch']
  %s0 = inlined_call_operand.hbm [shape: f32[128,128], index: 0, kind: input, shape index: {}]
  %s1 = inlined_call_operand.hbm [shape: f32[8,128,128], index: 1, kind: input, shape index: {}]
  %s2 = inlined_call_operand.hbm [shape: f32[8,128,128], index: 2, kind: input, shape index: {}]
  %s3 = inlined_call_operand.hbm [shape: f32[8,128,128], index: 3, kind: input, shape index: {}]
  %s4 = inlined_call_operand.hbm [shape: f32[8,128,128], index: 4, kind: output, shape index: {}]
  %s5 = sld [smem:[#allocation0]]
  $region65: #{tpu_custom_call.1} parent=0
    _
  %s7 = ssub.s32 1, %s5
  %s8 = scalar_select 0, %s7, %s5
  $region1: #{tpu_custom_call.1} parent=0
    #allocation2 [shape = 'u8[65536]{0}', space=vmem, size = 0x10000, scoped, tag = 'input window, operand 0, single buffered']
    #allocation3 [shape = 's32[2]{0}', space=sflag, size = 0x8, scoped, tag = 'scoped memory for tpu_custom_call.1']
    #allocation4 [shape = 's32[2]{0}', space=sflag, size = 0x8, scoped, tag = 'scoped memory for tpu_custom_call.1']
    #allocation5 [shape = 'u8[262144]{0}', space=vmem, size = 0x40000, scoped, tag = 'input window, operand 1']
    #allocation6 [shape = 's32[2]{0}', space=sflag, size = 0x8, scoped, tag = 'scoped memory for tpu_custom_call.1']
    #allocation7 [shape = 'u8[262144]{0}', space=vmem, size = 0x40000, scoped, tag = 'input window, operand 2']
    #allocation8 [shape = 'u8[262144]{0}', space=vmem, size = 0x40000, scoped, tag = 'input window, operand 3']
    #allocation9 [shape = 's32[2]{0}', space=sflag, size = 0x8, scoped, tag = 'scoped memory for tpu_custom_call.1']
    #allocation10 [shape = 'u8[262144]{0}', space=vmem, size = 0x40000, scoped, tag = 'output window, operand 0']
    %9 = vsyncpa [#allocation3], 0
    %10 = vsyncpa [#allocation6], 0
    %s11 = scalar_lea.sflag [#allocation6], 1
    %12 = vsyncpa %s11, 0
    %13 = vsyncpa [#allocation9], 0
    %s14 = scalar_lea.sflag [#allocation9], 1
    %15 = vsyncpa %s14, 0
    %16 = vsyncpa [#allocation4], 0
    %s17 = scalar_lea.sflag [#allocation4], 1
    %18 = vsyncpa %s17, 0
    loop: start=0, step=1, limit=6
    $region2: #{tpu_custom_call.1} parent=1 // loop_pre_header
      _
    $region3: #{tpu_custom_call.1} parent=1 // loop_header
      %s20 = sphi 0, %s24
      %p21 = scmp.ge.s32.totalorder %s20, 6
      %s28 = sphi 0, %s28
      %s30 = sphi 0, %s28
      %s31 = sphi 0, %s30
      %s45 = sphi 0, %s31
      %s51 = sphi 0, %s53
      %s54 = sphi 0, %s51
      %s55 = sphi 0, %s54
      %s71 = sphi 0, %s55
      %s77 = sphi 0, %s79
      %s80 = sphi 0, %s77
      %s81 = sphi 0, %s80
      %s97 = sphi 0, %s81
      %s103 = sphi 0, %s105
      %s106 = sphi 0, %s103
      %s107 = sphi 0, %s106
      %s123 = sphi 0, %s107
      %s129 = sphi 0, %s131
      %s132 = sphi 0, %s129
      %s133 = sphi 0, %s132
      %s149 = sphi 0, %s133
    $region4: #{tpu_custom_call.1} parent=1 // loop_header_branch
      %23 = sbr.rel (%p21) target = $region8
    $region5: #{tpu_custom_call.1} parent=1 // loop_body
      %s25 = ssub.s32 %s20, 1
      %s26 = ssub.s32 %s20, 2
      %s27 = sadd.s32 %s20, 1
      %s29 = sadd.s32 %s28, 1
      %p32 = scmp.eq.s32.totalorder %s20, 3
      %p33 = scmp.ne.s32.totalorder %s28, %s30
      %p34 = scmp.eq.s32.totalorder %s20, 0
      %p35 = por %p33, %p34
      %p36 = scmp.ne.s32.totalorder %s28, %s30
      %p37 = scmp.eq.s32.totalorder %s25, 3
      %p38 = por %p36, %p37
      %p39 = scmp.ne.s32.totalorder %s30, %s31
      %p40 = scmp.eq.s32.totalorder %s25, 0
      %p41 = por %p39, %p40
      %p42 = scmp.ne.s32.totalorder %s30, %s31
      %p43 = scmp.eq.s32.totalorder %s26, 3
      %p44 = por %p42, %p43
      %p46 = scmp.ne.s32.totalorder %s31, %s45
      %p47 = scmp.eq.s32.totalorder %s26, 0
      %p48 = por %p46, %p47
      %s49 = ssub.s32 %s20, %s27
      %p50 = scmp.eq.s32.totalorder %s49, 0
      %s52 = sadd.s32 %s51, 1
      %s53 = scalar_select %p50, %s51, %s52
      %p56 = pneg %p50
      %p57 = scmp.eq.s32.totalorder %s20, 3
      %p58 = por %p56, %p57
      %p59 = scmp.ne.s32.totalorder %s51, %s54
      %p60 = scmp.eq.s32.totalorder %s20, 0
      %p61 = por %p59, %p60
      %p62 = scmp.ne.s32.totalorder %s51, %s54
      %p63 = scmp.eq.s32.totalorder %s25, 3
      %p64 = por %p62, %p63
      %p65 = scmp.ne.s32.totalorder %s54, %s55
      %p66 = scmp.eq.s32.totalorder %s25, 0
      %p67 = por %p65, %p66
      %p68 = scmp.ne.s32.totalorder %s54, %s55
      %p69 = scmp.eq.s32.totalorder %s26, 3
      %p70 = por %p68, %p69
      %p72 = scmp.ne.s32.totalorder %s55, %s71
      %p73 = scmp.eq.s32.totalorder %s26, 0
      %p74 = por %p72, %p73
      %s75 = ssub.s32 %s20, %s27
      %p76 = scmp.eq.s32.totalorder %s75, 0
      %s78 = sadd.s32 %s77, 1
      %s79 = scalar_select %p76, %s77, %s78
      %p82 = pneg %p76
      %p83 = scmp.eq.s32.totalorder %s20, 3
      %p84 = por %p82, %p83
      %p85 = scmp.ne.s32.totalorder %s77, %s80
      %p86 = scmp.eq.s32.totalorder %s20, 0
      %p87 = por %p85, %p86
      %p88 = scmp.ne.s32.totalorder %s77, %s80
      %p89 = scmp.eq.s32.totalorder %s25, 3
      %p90 = por %p88, %p89
      %p91 = scmp.ne.s32.totalorder %s80, %s81
      %p92 = scmp.eq.s32.totalorder %s25, 0
      %p93 = por %p91, %p92
      %p94 = scmp.ne.s32.totalorder %s80, %s81
      %p95 = scmp.eq.s32.totalorder %s26, 3
      %p96 = por %p94, %p95
      %p98 = scmp.ne.s32.totalorder %s81, %s97
      %p99 = scmp.eq.s32.totalorder %s26, 0
      %p100 = por %p98, %p99
      %s101 = ssub.s32 %s20, %s27
      %p102 = scmp.eq.s32.totalorder %s101, 0
      %s104 = sadd.s32 %s103, 1
      %s105 = scalar_select %p102, %s103, %s104
      %p108 = pneg %p102
      %p109 = scmp.eq.s32.totalorder %s20, 3
      %p110 = por %p108, %p109
      %p111 = scmp.ne.s32.totalorder %s103, %s106
      %p112 = scmp.eq.s32.totalorder %s20, 0
      %p113 = por %p111, %p112
      %p114 = scmp.ne.s32.totalorder %s103, %s106
      %p115 = scmp.eq.s32.totalorder %s25, 3
      %p116 = por %p114, %p115
      %p117 = scmp.ne.s32.totalorder %s106, %s107
      %p118 = scmp.eq.s32.totalorder %s25, 0
      %p119 = por %p117, %p118
      %p120 = scmp.ne.s32.totalorder %s106, %s107
      %p121 = scmp.eq.s32.totalorder %s26, 3
      %p122 = por %p120, %p121
      %p124 = scmp.ne.s32.totalorder %s107, %s123
      %p125 = scmp.eq.s32.totalorder %s26, 0
      %p126 = por %p124, %p125
      %s127 = ssub.s32 %s20, %s27
      %p128 = scmp.eq.s32.totalorder %s127, 0
      %s130 = sadd.s32 %s129, 1
      %s131 = scalar_select %p128, %s129, %s130
      %p134 = pneg %p128
      %p135 = scmp.eq.s32.totalorder %s20, 3
      %p136 = por %p134, %p135
      %p137 = scmp.ne.s32.totalorder %s129, %s132
      %p138 = scmp.eq.s32.totalorder %s20, 0
      %p139 = por %p137, %p138
      %p140 = scmp.ne.s32.totalorder %s129, %s132
      %p141 = scmp.eq.s32.totalorder %s25, 3
      %p142 = por %p140, %p141
      %p143 = scmp.ne.s32.totalorder %s132, %s133
      %p144 = scmp.eq.s32.totalorder %s25, 0
      %p145 = por %p143, %p144
      %p146 = scmp.ne.s32.totalorder %s132, %s133
      %p147 = scmp.eq.s32.totalorder %s26, 3
      %p148 = por %p146, %p147
      %p150 = scmp.ne.s32.totalorder %s133, %s149
      %p151 = scmp.eq.s32.totalorder %s26, 0
      %p152 = por %p150, %p151
      %p153 = scmp.le.s32.totalorder 1, %s20
      %p154 = scmp.lt.s32.totalorder %s20, 5
      %p155 = pnand %p153, %p154
      %p156 = pneg %p155
      // Predicated region
      $region9: #{tpu_custom_call.1} parent=5 // pred_check
        _
      $region10: #{tpu_custom_call.1} parent=5 // pred_check_branch
        %158 = sbr.rel (%p155) target = $region12
      $region11: #{tpu_custom_call.1} parent=5 // pred_region
        %s159 = ssub.s32 %s20, 1
        // Predicated region
        $region13: #{tpu_custom_call.1} parent=11 // pred_check
          %p160 = pneg %p41
        $region14: #{tpu_custom_call.1} parent=11 // pred_check_branch
          %162 = sbr.rel (%p160) target = $region16
        $region15: #{tpu_custom_call.1} parent=11 // pred_region
          %s164 = ssub.s32 2048, 2048
          %165 = vsyncadd [#allocation3], %s164
          %s166 = sshll.u32 [#allocation2], 4
          %s167 = int_to_ptr.vmem [resolvable:$true] %s166
          %172 = dma.hbm_to_vmem [thread:$0]  %s0, 2048, %s167, [#allocation3], 128, 128, 8
        $region16: #{tpu_custom_call.1} parent=11 // pred_fallthru
          _
      $region12: #{tpu_custom_call.1} parent=5 // pred_fallthru
        _
      %p173 = scmp.lt.s32.totalorder %s20, 4
      // Predicated region
      $region17: #{tpu_custom_call.1} parent=5 // pred_check
        %p174 = pneg %p173
      $region18: #{tpu_custom_call.1} parent=5 // pred_check_branch
        %176 = sbr.rel (%p174) target = $region20
      $region19: #{tpu_custom_call.1} parent=5 // pred_region
        // Predicated region
        $region21: #{tpu_custom_call.1} parent=19 // pred_check
          %p177 = pneg %p61
        $region22: #{tpu_custom_call.1} parent=19 // pred_check_branch
          %179 = sbr.rel (%p177) target = $region24
        $region23: #{tpu_custom_call.1} parent=19 // pred_region
          %s180 = sand.u32 %s20, 1
          %s181 = scalar_lea.sflag [#allocation6], %s180
          %s182 = sand.u32 %s51, 1
          %s183 = smul.addr %s182, 256
          %s184 = scalar_lea.vmem [#allocation5], %s183
          %s185 = smul.u32 2, %s20
          %s187 = ssub.s32 4096, 4096
          %188 = vsyncadd %s181, %s187
          %s189 = smul.addr %s185, 16
          %s190 = smul.addr %s189, 128
          %s191 = scalar_lea.hbm %s1, %s190
          %s192 = sshll.u32 %s184, 4
          %s193 = int_to_ptr.vmem [resolvable:$true] %s192
          %198 = dma.hbm_to_vmem [thread:$0]  %s191, 4096, %s193, %s181, 128, 128, 8
        $region24: #{tpu_custom_call.1} parent=19 // pred_fallthru
          _
        // Predicated region
        $region25: #{tpu_custom_call.1} parent=19 // pred_check
          %p199 = pneg %p87
        $region26: #{tpu_custom_call.1} parent=19 // pred_check_branch
          %201 = sbr.rel (%p199) target = $region28
        $region27: #{tpu_custom_call.1} parent=19 // pred_region
          %s202 = sand.u32 %s20, 1
          %s203 = scalar_lea.sflag [#allocation6], %s202
          %s204 = sand.u32 %s77, 1
          %s205 = smul.addr %s204, 256
          %s206 = scalar_lea.vmem [#allocation7], %s205
          %s207 = smul.u32 2, %s20
          %s209 = ssub.s32 4096, 4096
          %210 = vsyncadd %s203, %s209
          %s211 = smul.addr %s207, 16
          %s212 = smul.addr %s211, 128
          %s213 = scalar_lea.hbm %s2, %s212
          %s214 = sshll.u32 %s206, 4
          %s215 = int_to_ptr.vmem [resolvable:$true] %s214
          %220 = dma.hbm_to_vmem [thread:$0]  %s213, 4096, %s215, %s203, 128, 128, 8
        $region28: #{tpu_custom_call.1} parent=19 // pred_fallthru
          _
        // Predicated region
        $region29: #{tpu_custom_call.1} parent=19 // pred_check
          %p221 = pneg %p113
        $region30: #{tpu_custom_call.1} parent=19 // pred_check_branch
          %223 = sbr.rel (%p221) target = $region32
        $region31: #{tpu_custom_call.1} parent=19 // pred_region
          %s224 = sand.u32 %s103, 1
          %s225 = scalar_lea.sflag [#allocation9], %s224
          %s226 = sand.u32 %s103, 1
          %s227 = smul.addr %s226, 256
          %s228 = scalar_lea.vmem [#allocation8], %s227
          %s229 = smul.u32 2, %s20
          %s231 = ssub.s32 4096, 4096
          %232 = vsyncadd %s225, %s231
          %s233 = smul.addr %s229, 16
          %s234 = smul.addr %s233, 128
          %s235 = scalar_lea.hbm %s3, %s234
          %s236 = sshll.u32 %s228, 4
          %s237 = int_to_ptr.vmem [resolvable:$true] %s236
          %242 = dma.hbm_to_vmem [thread:$0]  %s235, 4096, %s237, %s225, 128, 128, 8
        $region32: #{tpu_custom_call.1} parent=19 // pred_fallthru
          _
      $region20: #{tpu_custom_call.1} parent=5 // pred_fallthru
        _
      %p243 = scmp.le.s32.totalorder 1, %s20
      %p244 = scmp.lt.s32.totalorder %s20, 5
      %p245 = pnand %p243, %p244
      %p246 = pneg %p245
      // Predicated region
      $region33: #{tpu_custom_call.1} parent=5 // pred_check
        _
      $region34: #{tpu_custom_call.1} parent=5 // pred_check_branch
        %248 = sbr.rel (%p245) target = $region36
      $region35: #{tpu_custom_call.1} parent=5 // pred_region
        %s249 = ssub.s32 %s20, 1
        // Predicated region
        $region37: #{tpu_custom_call.1} parent=35 // pred_check
          %p250 = pneg %p41
        $region38: #{tpu_custom_call.1} parent=35 // pred_check_branch
          %252 = sbr.rel (%p250) target = $region40
        $region39: #{tpu_custom_call.1} parent=35 // pred_region
          %253 = dma.done [#allocation3], 2048
        $region40: #{tpu_custom_call.1} parent=35 // pred_fallthru
          _
        %s254 = sand.u32 %s25, 1
        %s255 = scalar_lea.sflag [#allocation6], %s254
        %s256 = sand.u32 %s54, 1
        %s257 = smul.addr %s256, 256
        %s258 = scalar_lea.vmem [#allocation5], %s257
        // Predicated region
        $region41: #{tpu_custom_call.1} parent=35 // pred_check
          %p259 = pneg %p67
        $region42: #{tpu_custom_call.1} parent=35 // pred_check_branch
          %261 = sbr.rel (%p259) target = $region44
        $region43: #{tpu_custom_call.1} parent=35 // pred_region
          %262 = dma.done %s255, 4096
        $region44: #{tpu_custom_call.1} parent=35 // pred_fallthru
          _
        %s263 = sand.u32 %s25, 1
        %s264 = scalar_lea.sflag [#allocation6], %s263
        %s265 = sand.u32 %s80, 1
        %s266 = smul.addr %s265, 256
        %s267 = scalar_lea.vmem [#allocation7], %s266
        // Predicated region
        $region45: #{tpu_custom_call.1} parent=35 // pred_check
          %p268 = pneg %p93
        $region46: #{tpu_custom_call.1} parent=35 // pred_check_branch
          %270 = sbr.rel (%p268) target = $region48
        $region47: #{tpu_custom_call.1} parent=35 // pred_region
          %271 = dma.done %s264, 4096
        $region48: #{tpu_custom_call.1} parent=35 // pred_fallthru
          _
        %s272 = sand.u32 %s106, 1
        %s273 = scalar_lea.sflag [#allocation9], %s272
        %s274 = sand.u32 %s106, 1
        %s275 = smul.addr %s274, 256
        %s276 = scalar_lea.vmem [#allocation8], %s275
        // Predicated region
        $region49: #{tpu_custom_call.1} parent=35 // pred_check
          %p277 = pneg %p119
        $region50: #{tpu_custom_call.1} parent=35 // pred_check_branch
          %279 = sbr.rel (%p277) target = $region52
        $region51: #{tpu_custom_call.1} parent=35 // pred_region
          %280 = dma.done %s273, 4096
        $region52: #{tpu_custom_call.1} parent=35 // pred_fallthru
          _
        %p281 = pneg %p41
        %p282 = pneg %p38
        %s283 = sand.u32 %s25, 1
        %s284 = scalar_lea.sflag [#allocation6], %s283
        %s285 = sand.u32 %s54, 1
        %s286 = smul.addr %s285, 256
        %s287 = scalar_lea.vmem [#allocation5], %s286
        %p288 = pneg %p67
        %p289 = pneg %p64
        %s290 = sand.u32 %s25, 1
        %s291 = scalar_lea.sflag [#allocation6], %s290
        %s292 = sand.u32 %s80, 1
        %s293 = smul.addr %s292, 256
        %s294 = scalar_lea.vmem [#allocation7], %s293
        %p295 = pneg %p93
        %p296 = pneg %p90
        %s297 = sand.u32 %s106, 1
        %s298 = scalar_lea.sflag [#allocation9], %s297
        %s299 = sand.u32 %s106, 1
        %s300 = smul.addr %s299, 256
        %s301 = scalar_lea.vmem [#allocation8], %s300
        %p302 = pneg %p119
        %p303 = pneg %p116
        %p304 = pneg %p145
        %p305 = pneg %p142
        %s306 = sand.u32 %s132, 1
        %s307 = scalar_lea.sflag [#allocation4], %s306
        %s308 = sand.u32 %s132, 1
        %s309 = smul.addr %s308, 256
        %s310 = scalar_lea.vmem [#allocation10], %s309
        %s311 = smul.u32 2, %s25
        %s312 = smul.u32 2, %s25
        %s313 = smul.u32 2, %s25
        %s314 = smul.u32 2, %s25
        %v315 = vld [vmem:[%s258] sm:$0xff]
        %v316 = vld [vmem:[%s258 + $0x8] sm:$0xff]
        %v317 = vld [vmem:[%s258 + $0x10] sm:$0xff]
        %v318 = vld [vmem:[%s258 + $0x18] sm:$0xff]
        %v319 = vld [vmem:[%s258 + $0x20] sm:$0xff]
        %v320 = vld [vmem:[%s258 + $0x28] sm:$0xff]
        %v321 = vld [vmem:[%s258 + $0x30] sm:$0xff]
        %v322 = vld [vmem:[%s258 + $0x38] sm:$0xff]
        %v323 = vld [vmem:[%s258 + $0x40] sm:$0xff]
        %v324 = vld [vmem:[%s258 + $0x48] sm:$0xff]
        %v325 = vld [vmem:[%s258 + $0x50] sm:$0xff]
        %v326 = vld [vmem:[%s258 + $0x58] sm:$0xff]
        %v327 = vld [vmem:[%s258 + $0x60] sm:$0xff]
        %v328 = vld [vmem:[%s258 + $0x68] sm:$0xff]
        %v329 = vld [vmem:[%s258 + $0x70] sm:$0xff]
        %v330 = vld [vmem:[%s258 + $0x78] sm:$0xff]
        %v331 = vld [vmem:[%s258 + $0x80] sm:$0xff]
        %v332 = vld [vmem:[%s258 + $0x88] sm:$0xff]
        %v333 = vld [vmem:[%s258 + $0x90] sm:$0xff]
        %v334 = vld [vmem:[%s258 + $0x98] sm:$0xff]
        %v335 = vld [vmem:[%s258 + $0xa0] sm:$0xff]
        %v336 = vld [vmem:[%s258 + $0xa8] sm:$0xff]
        %v337 = vld [vmem:[%s258 + $0xb0] sm:$0xff]
        %v338 = vld [vmem:[%s258 + $0xb8] sm:$0xff]
        %v339 = vld [vmem:[%s258 + $0xc0] sm:$0xff]
        %v340 = vld [vmem:[%s258 + $0xc8] sm:$0xff]
        %v341 = vld [vmem:[%s258 + $0xd0] sm:$0xff]
        %v342 = vld [vmem:[%s258 + $0xd8] sm:$0xff]
        %v343 = vld [vmem:[%s258 + $0xe0] sm:$0xff]
        %v344 = vld [vmem:[%s258 + $0xe8] sm:$0xff]
        %v345 = vld [vmem:[%s258 + $0xf0] sm:$0xff]
        %v346 = vld [vmem:[%s258 + $0xf8] sm:$0xff]
        %v347 = vld [vmem:[%s267] sm:$0xff]
        %v348 = vld [vmem:[%s267 + $0x8] sm:$0xff]
        %v349 = vld [vmem:[%s267 + $0x10] sm:$0xff]
        %v350 = vld [vmem:[%s267 + $0x18] sm:$0xff]
        %v351 = vld [vmem:[%s267 + $0x20] sm:$0xff]
        %v352 = vld [vmem:[%s267 + $0x28] sm:$0xff]
        %v353 = vld [vmem:[%s267 + $0x30] sm:$0xff]
        %v354 = vld [vmem:[%s267 + $0x38] sm:$0xff]
        %v355 = vld [vmem:[%s267 + $0x40] sm:$0xff]
        %v356 = vld [vmem:[%s267 + $0x48] sm:$0xff]
        %v357 = vld [vmem:[%s267 + $0x50] sm:$0xff]
        %v358 = vld [vmem:[%s267 + $0x58] sm:$0xff]
        %v359 = vld [vmem:[%s267 + $0x60] sm:$0xff]
        %v360 = vld [vmem:[%s267 + $0x68] sm:$0xff]
        %v361 = vld [vmem:[%s267 + $0x70] sm:$0xff]
        %v362 = vld [vmem:[%s267 + $0x78] sm:$0xff]
        %v363 = vld [vmem:[%s267 + $0x80] sm:$0xff]
        %v364 = vld [vmem:[%s267 + $0x88] sm:$0xff]
        %v365 = vld [vmem:[%s267 + $0x90] sm:$0xff]
        %v366 = vld [vmem:[%s267 + $0x98] sm:$0xff]
        %v367 = vld [vmem:[%s267 + $0xa0] sm:$0xff]
        %v368 = vld [vmem:[%s267 + $0xa8] sm:$0xff]
        %v369 = vld [vmem:[%s267 + $0xb0] sm:$0xff]
        %v370 = vld [vmem:[%s267 + $0xb8] sm:$0xff]
        %v371 = vld [vmem:[%s267 + $0xc0] sm:$0xff]
        %v372 = vld [vmem:[%s267 + $0xc8] sm:$0xff]
        %v373 = vld [vmem:[%s267 + $0xd0] sm:$0xff]
        %v374 = vld [vmem:[%s267 + $0xd8] sm:$0xff]
        %v375 = vld [vmem:[%s267 + $0xe0] sm:$0xff]
        %v376 = vld [vmem:[%s267 + $0xe8] sm:$0xff]
        %v377 = vld [vmem:[%s267 + $0xf0] sm:$0xff]
        %v378 = vld [vmem:[%s267 + $0xf8] sm:$0xff]
        %379 = vmatprep.subr.mxu0 0.0
        %380 = vmatpush1.xpose.msra.mxu0 %v362
        %381 = vmatprep.subr.mxu0 0.0
        %382 = vmatpush1.xpose.msra.mxu0 %v361
        %383 = vmatprep.subr.mxu0 0.0
        %384 = vmatpush1.xpose.msra.mxu0 %v360
        %385 = vmatprep.subr.mxu0 0.0
        %386 = vmatpush1.xpose.msra.mxu0 %v359
        %387 = vmatprep.subr.mxu0 0.0
        %388 = vmatpush1.xpose.msra.mxu0 %v358
        %389 = vmatprep.subr.mxu0 0.0
        %390 = vmatpush1.xpose.msra.mxu0 %v357
        %391 = vmatprep.subr.mxu0 0.0
        %392 = vmatpush1.xpose.msra.mxu0 %v356
        %393 = vmatprep.subr.mxu0 0.0
        %394 = vmatpush1.xpose.msra.mxu0 %v355
        %395 = vmatprep.subr.mxu0 0.0
        %396 = vmatpush1.xpose.msra.mxu0 %v354
        %397 = vmatprep.subr.mxu0 0.0
        %398 = vmatpush1.xpose.msra.mxu0 %v353
        %399 = vmatprep.subr.mxu0 0.0
        %400 = vmatpush1.xpose.msra.mxu0 %v352
        %401 = vmatprep.subr.mxu0 0.0
        %402 = vmatpush1.xpose.msra.mxu0 %v351
        %403 = vmatprep.subr.mxu0 0.0
        %404 = vmatpush1.xpose.msra.mxu0 %v350
        %405 = vmatprep.subr.mxu0 0.0
        %406 = vmatpush1.xpose.msra.mxu0 %v349
        %407 = vmatprep.subr.mxu0 0.0
        %408 = vmatpush1.xpose.msra.mxu0 %v348
        %409 = vmatprep.subr.mxu0 0.0
        %410 = vmatpush1.xpose.msra.mxu0 %v347
        %411 = vmatprep.subr.mxu0 0.0
        %412 = vmatpush2.xpose.msra.mxu0 0.0
        %413 = vmatprep.subr.mxu0 0.0
        %414 = vmatpush2.xpose.msra.mxu0 0.0
        %415 = vmatprep.subr.mxu0 0.0
        %416 = vmatpush2.xpose.msra.mxu0 0.0
        %417 = vmatprep.subr.mxu0 0.0
        %418 = vmatpush2.xpose.msra.mxu0 0.0
        %419 = vmatprep.subr.mxu0 0.0
        %420 = vmatpush2.xpose.msra.mxu0 0.0
        %421 = vmatprep.subr.mxu0 0.0
        %422 = vmatpush2.xpose.msra.mxu0 0.0
        %423 = vmatprep.subr.mxu0 0.0
        %424 = vmatpush2.xpose.msra.mxu0 0.0
        %425 = vmatprep.subr.mxu0 0.0
        %426 = vmatpush2.xpose.msra.mxu0 0.0
        %427 = vmatprep.subr.mxu0 0.0
        %428 = vmatpush2.xpose.msra.mxu0 0.0
        %429 = vmatprep.subr.mxu0 0.0
        %430 = vmatpush2.xpose.msra.mxu0 0.0
        %431 = vmatprep.subr.mxu0 0.0
        %432 = vmatpush2.xpose.msra.mxu0 0.0
        %433 = vmatprep.subr.mxu0 0.0
        %434 = vmatpush2.xpose.msra.mxu0 0.0
        %435 = vmatprep.subr.mxu0 0.0
        %436 = vmatpush2.xpose.msra.mxu0 0.0
        %437 = vmatprep.subr.mxu0 0.0
        %438 = vmatpush2.xpose.msra.mxu0 0.0
        %439 = vmatprep.subr.mxu0 0.0
        %440 = vmatpush2.xpose.msra.mxu0 0.0
        %441 = vmatprep.subr.mxu0 0.0
        %442 = vmatpush2.xpose.msra.mxu0 0.0
        %443 = vmatprep.mubr.f32.mxu0 0.0
        %444 = vmatmul.mubr.f32.gmra.mxu0 %v315
        %v445 = vpop.f32.mrf.mxu0
        %v446 = vadd.f32 0.0, %v445
        %v447 = vpop.f32.mrf.mxu0
        %448 = vmatprep.mubr.f32.mxu0 0.0
        %449 = vmatmul.mubr.f32.gmra.mxu0 %v316
        %v450 = vpop.f32.mrf.mxu0
        %v451 = vadd.f32 0.0, %v450
        %v452 = vpop.f32.mrf.mxu0
        %453 = vmatprep.mubr.f32.mxu0 0.0
        %454 = vmatmul.mubr.f32.gmra.mxu0 %v317
        %v455 = vpop.f32.mrf.mxu0
        %v456 = vadd.f32 0.0, %v455
        %v457 = vpop.f32.mrf.mxu0
        %458 = vmatprep.mubr.f32.mxu0 0.0
        %459 = vmatmul.mubr.f32.gmra.mxu0 %v318
        %v460 = vpop.f32.mrf.mxu0
        %v461 = vadd.f32 0.0, %v460
        %v462 = vpop.f32.mrf.mxu0
        %463 = vmatprep.mubr.f32.mxu0 0.0
        %464 = vmatmul.mubr.f32.gmra.mxu0 %v319
        %v465 = vpop.f32.mrf.mxu0
        %v466 = vadd.f32 0.0, %v465
        %v467 = vpop.f32.mrf.mxu0
        %468 = vmatprep.mubr.f32.mxu0 0.0
        %469 = vmatmul.mubr.f32.gmra.mxu0 %v320
        %v470 = vpop.f32.mrf.mxu0
        %v471 = vadd.f32 0.0, %v470
        %v472 = vpop.f32.mrf.mxu0
        %473 = vmatprep.mubr.f32.mxu0 0.0
        %474 = vmatmul.mubr.f32.gmra.mxu0 %v321
        %v475 = vpop.f32.mrf.mxu0
        %v476 = vadd.f32 0.0, %v475
        %v477 = vpop.f32.mrf.mxu0
        %478 = vmatprep.mubr.f32.mxu0 0.0
        %479 = vmatmul.mubr.f32.gmra.mxu0 %v322
        %v480 = vpop.f32.mrf.mxu0
        %v481 = vadd.f32 0.0, %v480
        %v482 = vpop.f32.mrf.mxu0
        %483 = vmatprep.mubr.f32.mxu0 0.0
        %484 = vmatmul.mubr.f32.gmra.mxu0 %v323
        %v485 = vpop.f32.mrf.mxu0
        %v486 = vadd.f32 0.0, %v485
        %v487 = vpop.f32.mrf.mxu0
        %488 = vmatprep.mubr.f32.mxu0 0.0
        %489 = vmatmul.mubr.f32.gmra.mxu0 %v324
        %v490 = vpop.f32.mrf.mxu0
        %v491 = vadd.f32 0.0, %v490
        %v492 = vpop.f32.mrf.mxu0
        %493 = vmatprep.mubr.f32.mxu0 0.0
        %494 = vmatmul.mubr.f32.gmra.mxu0 %v325
        %v495 = vpop.f32.mrf.mxu0
        %v496 = vadd.f32 0.0, %v495
        %v497 = vpop.f32.mrf.mxu0
        %498 = vmatprep.mubr.f32.mxu0 0.0
        %499 = vmatmul.mubr.f32.gmra.mxu0 %v326
        %v500 = vpop.f32.mrf.mxu0
        %v501 = vadd.f32 0.0, %v500
        %v502 = vpop.f32.mrf.mxu0
        %503 = vmatprep.mubr.f32.mxu0 0.0
        %504 = vmatmul.mubr.f32.gmra.mxu0 %v327
        %v505 = vpop.f32.mrf.mxu0
        %v506 = vadd.f32 0.0, %v505
        %v507 = vpop.f32.mrf.mxu0
        %508 = vmatprep.mubr.f32.mxu0 0.0
        %509 = vmatmul.mubr.f32.gmra.mxu0 %v328
        %v510 = vpop.f32.mrf.mxu0
        %v511 = vadd.f32 0.0, %v510
        %v512 = vpop.f32.mrf.mxu0
        %513 = vmatprep.mubr.f32.mxu0 0.0
        %514 = vmatmul.mubr.f32.gmra.mxu0 %v329
        %v515 = vpop.f32.mrf.mxu0
        %v516 = vadd.f32 0.0, %v515
        %v517 = vpop.f32.mrf.mxu0
        %518 = vmatprep.mubr.f32.mxu0 0.0
        %519 = vmatmul.mubr.f32.gmra.mxu0 %v330
        %v520 = vpop.f32.mrf.mxu0
        %v521 = vadd.f32 0.0, %v520
        %v522 = vpop.f32.mrf.mxu0
        %523 = vdwg.mxu0
        %524 = vmatprep.subr.mxu0 0.0
        %525 = vmatpush1.xpose.msra.mxu0 %v378
        %526 = vmatprep.subr.mxu0 0.0
        %527 = vmatpush1.xpose.msra.mxu0 %v377
        %528 = vmatprep.subr.mxu0 0.0
        %529 = vmatpush1.xpose.msra.mxu0 %v376
        %530 = vmatprep.subr.mxu0 0.0
        %531 = vmatpush1.xpose.msra.mxu0 %v375
        %532 = vmatprep.subr.mxu0 0.0
        %533 = vmatpush1.xpose.msra.mxu0 %v374
        %534 = vmatprep.subr.mxu0 0.0
        %535 = vmatpush1.xpose.msra.mxu0 %v373
        %536 = vmatprep.subr.mxu0 0.0
        %537 = vmatpush1.xpose.msra.mxu0 %v372
        %538 = vmatprep.subr.mxu0 0.0
        %539 = vmatpush1.xpose.msra.mxu0 %v371
        %540 = vmatprep.subr.mxu0 0.0
        %541 = vmatpush1.xpose.msra.mxu0 %v370
        %542 = vmatprep.subr.mxu0 0.0
        %543 = vmatpush1.xpose.msra.mxu0 %v369
        %544 = vmatprep.subr.mxu0 0.0
        %545 = vmatpush1.xpose.msra.mxu0 %v368
        %546 = vmatprep.subr.mxu0 0.0
        %547 = vmatpush1.xpose.msra.mxu0 %v367
        %548 = vmatprep.subr.mxu0 0.0
        %549 = vmatpush1.xpose.msra.mxu0 %v366
        %550 = vmatprep.subr.mxu0 0.0
        %551 = vmatpush1.xpose.msra.mxu0 %v365
        %552 = vmatprep.subr.mxu0 0.0
        %553 = vmatpush1.xpose.msra.mxu0 %v364
        %554 = vmatprep.subr.mxu0 0.0
        %555 = vmatpush1.xpose.msra.mxu0 %v363
        %556 = vmatprep.subr.mxu0 0.0
        %557 = vmatpush2.xpose.msra.mxu0 0.0
        %558 = vmatprep.subr.mxu0 0.0
        %559 = vmatpush2.xpose.msra.mxu0 0.0
        %560 = vmatprep.subr.mxu0 0.0
        %561 = vmatpush2.xpose.msra.mxu0 0.0
        %562 = vmatprep.subr.mxu0 0.0
        %563 = vmatpush2.xpose.msra.mxu0 0.0
        %564 = vmatprep.subr.mxu0 0.0
        %565 = vmatpush2.xpose.msra.mxu0 0.0
        %566 = vmatprep.subr.mxu0 0.0
        %567 = vmatpush2.xpose.msra.mxu0 0.0
        %568 = vmatprep.subr.mxu0 0.0
        %569 = vmatpush2.xpose.msra.mxu0 0.0
        %570 = vmatprep.subr.mxu0 0.0
        %571 = vmatpush2.xpose.msra.mxu0 0.0
        %572 = vmatprep.subr.mxu0 0.0
        %573 = vmatpush2.xpose.msra.mxu0 0.0
        %574 = vmatprep.subr.mxu0 0.0
        %575 = vmatpush2.xpose.msra.mxu0 0.0
        %576 = vmatprep.subr.mxu0 0.0
        %577 = vmatpush2.xpose.msra.mxu0 0.0
        %578 = vmatprep.subr.mxu0 0.0
        %579 = vmatpush2.xpose.msra.mxu0 0.0
        %580 = vmatprep.subr.mxu0 0.0
        %581 = vmatpush2.xpose.msra.mxu0 0.0
        %582 = vmatprep.subr.mxu0 0.0
        %583 = vmatpush2.xpose.msra.mxu0 0.0
        %584 = vmatprep.subr.mxu0 0.0
        %585 = vmatpush2.xpose.msra.mxu0 0.0
        %586 = vmatprep.subr.mxu0 0.0
        %587 = vmatpush2.xpose.msra.mxu0 0.0
        %588 = vmatprep.mubr.f32.mxu0 0.0
        %589 = vmatmul.mubr.f32.gmra.mxu0 %v331
        %v590 = vpop.f32.mrf.mxu0
        %v591 = vadd.f32 0.0, %v590
        %v592 = vpop.f32.mrf.mxu0
        %593 = vmatprep.mubr.f32.mxu0 0.0
        %594 = vmatmul.mubr.f32.gmra.mxu0 %v332
        %v595 = vpop.f32.mrf.mxu0
        %v596 = vadd.f32 0.0, %v595
        %v597 = vpop.f32.mrf.mxu0
        %598 = vmatprep.mubr.f32.mxu0 0.0
        %599 = vmatmul.mubr.f32.gmra.mxu0 %v333
        %v600 = vpop.f32.mrf.mxu0
        %v601 = vadd.f32 0.0, %v600
        %v602 = vpop.f32.mrf.mxu0
        %603 = vmatprep.mubr.f32.mxu0 0.0
        %604 = vmatmul.mubr.f32.gmra.mxu0 %v334
        %v605 = vpop.f32.mrf.mxu0
        %v606 = vadd.f32 0.0, %v605
        %v607 = vpop.f32.mrf.mxu0
        %608 = vmatprep.mubr.f32.mxu0 0.0
        %609 = vmatmul.mubr.f32.gmra.mxu0 %v335
        %v610 = vpop.f32.mrf.mxu0
        %v611 = vadd.f32 0.0, %v610
        %v612 = vpop.f32.mrf.mxu0
        %613 = vmatprep.mubr.f32.mxu0 0.0
        %614 = vmatmul.mubr.f32.gmra.mxu0 %v336
        %v615 = vpop.f32.mrf.mxu0
        %v616 = vadd.f32 0.0, %v615
        %v617 = vpop.f32.mrf.mxu0
        %618 = vmatprep.mubr.f32.mxu0 0.0
        %619 = vmatmul.mubr.f32.gmra.mxu0 %v337
        %v620 = vpop.f32.mrf.mxu0
        %v621 = vadd.f32 0.0, %v620
        %v622 = vpop.f32.mrf.mxu0
        %623 = vmatprep.mubr.f32.mxu0 0.0
        %624 = vmatmul.mubr.f32.gmra.mxu0 %v338
        %v625 = vpop.f32.mrf.mxu0
        %v626 = vadd.f32 0.0, %v625
        %v627 = vpop.f32.mrf.mxu0
        %628 = vmatprep.mubr.f32.mxu0 0.0
        %629 = vmatmul.mubr.f32.gmra.mxu0 %v339
        %v630 = vpop.f32.mrf.mxu0
        %v631 = vadd.f32 0.0, %v630
        %v632 = vpop.f32.mrf.mxu0
        %633 = vmatprep.mubr.f32.mxu0 0.0
        %634 = vmatmul.mubr.f32.gmra.mxu0 %v340
        %v635 = vpop.f32.mrf.mxu0
        %v636 = vadd.f32 0.0, %v635
        %v637 = vpop.f32.mrf.mxu0
        %638 = vmatprep.mubr.f32.mxu0 0.0
        %639 = vmatmul.mubr.f32.gmra.mxu0 %v341
        %v640 = vpop.f32.mrf.mxu0
        %v641 = vadd.f32 0.0, %v640
        %v642 = vpop.f32.mrf.mxu0
        %643 = vmatprep.mubr.f32.mxu0 0.0
        %644 = vmatmul.mubr.f32.gmra.mxu0 %v342
        %v645 = vpop.f32.mrf.mxu0
        %v646 = vadd.f32 0.0, %v645
        %v647 = vpop.f32.mrf.mxu0
        %648 = vmatprep.mubr.f32.mxu0 0.0
        %649 = vmatmul.mubr.f32.gmra.mxu0 %v343
        %v650 = vpop.f32.mrf.mxu0
        %v651 = vadd.f32 0.0, %v650
        %v652 = vpop.f32.mrf.mxu0
        %653 = vmatprep.mubr.f32.mxu0 0.0
        %654 = vmatmul.mubr.f32.gmra.mxu0 %v344
        %v655 = vpop.f32.mrf.mxu0
        %v656 = vadd.f32 0.0, %v655
        %v657 = vpop.f32.mrf.mxu0
        %658 = vmatprep.mubr.f32.mxu0 0.0
        %659 = vmatmul.mubr.f32.gmra.mxu0 %v345
        %v660 = vpop.f32.mrf.mxu0
        %v661 = vadd.f32 0.0, %v660
        %v662 = vpop.f32.mrf.mxu0
        %663 = vmatprep.mubr.f32.mxu0 0.0
        %664 = vmatmul.mubr.f32.gmra.mxu0 %v346
        %v665 = vpop.f32.mrf.mxu0
        %v666 = vadd.f32 0.0, %v665
        %v667 = vpop.f32.mrf.mxu0
        %668 = vdwg.mxu0
        %v669 = vmul.f32 %v446, 0.088388346
        %v670 = vmul.f32 %v451, 0.088388346
        %v671 = vmul.f32 %v456, 0.088388346
        %v672 = vmul.f32 %v461, 0.088388346
        %v673 = vmul.f32 %v466, 0.088388346
        %v674 = vmul.f32 %v471, 0.088388346
        %v675 = vmul.f32 %v476, 0.088388346
        %v676 = vmul.f32 %v481, 0.088388346
        %v677 = vmul.f32 %v486, 0.088388346
        %v678 = vmul.f32 %v491, 0.088388346
        %v679 = vmul.f32 %v496, 0.088388346
        %v680 = vmul.f32 %v501, 0.088388346
        %v681 = vmul.f32 %v506, 0.088388346
        %v682 = vmul.f32 %v511, 0.088388346
        %v683 = vmul.f32 %v516, 0.088388346
        %v684 = vmul.f32 %v521, 0.088388346
        %v685 = vmul.f32 %v591, 0.088388346
        %v686 = vmul.f32 %v596, 0.088388346
        %v687 = vmul.f32 %v601, 0.088388346
        %v688 = vmul.f32 %v606, 0.088388346
        %v689 = vmul.f32 %v611, 0.088388346
        %v690 = vmul.f32 %v616, 0.088388346
        %v691 = vmul.f32 %v621, 0.088388346
        %v692 = vmul.f32 %v626, 0.088388346
        %v693 = vmul.f32 %v631, 0.088388346
        %v694 = vmul.f32 %v636, 0.088388346
        %v695 = vmul.f32 %v641, 0.088388346
        %v696 = vmul.f32 %v646, 0.088388346
        %v697 = vmul.f32 %v651, 0.088388346
        %v698 = vmul.f32 %v656, 0.088388346
        %v699 = vmul.f32 %v661, 0.088388346
        %v700 = vmul.f32 %v666, 0.088388346
        %v701 = vld [vmem:[#allocation2] sm:$0xff]
        %v702 = vld [vmem:[#allocation2 + $0x8] sm:$0xff]
        %v703 = vld [vmem:[#allocation2 + $0x10] sm:$0xff]
        %v704 = vld [vmem:[#allocation2 + $0x18] sm:$0xff]
        %v705 = vld [vmem:[#allocation2 + $0x20] sm:$0xff]
        %v706 = vld [vmem:[#allocation2 + $0x28] sm:$0xff]
        %v707 = vld [vmem:[#allocation2 + $0x30] sm:$0xff]
        %v708 = vld [vmem:[#allocation2 + $0x38] sm:$0xff]
        %v709 = vld [vmem:[#allocation2 + $0x40] sm:$0xff]
        %v710 = vld [vmem:[#allocation2 + $0x48] sm:$0xff]
        %v711 = vld [vmem:[#allocation2 + $0x50] sm:$0xff]
        %v712 = vld [vmem:[#allocation2 + $0x58] sm:$0xff]
        %v713 = vld [vmem:[#allocation2 + $0x60] sm:$0xff]
        %v714 = vld [vmem:[#allocation2 + $0x68] sm:$0xff]
        %v715 = vld [vmem:[#allocation2 + $0x70] sm:$0xff]
        %v716 = vld [vmem:[#allocation2 + $0x78] sm:$0xff]
        %v717 = vadd.f32 %v669, %v701
        %v718 = vadd.f32 %v670, %v702
        %v719 = vadd.f32 %v671, %v703
        %v720 = vadd.f32 %v672, %v704
        %v721 = vadd.f32 %v673, %v705
        %v722 = vadd.f32 %v674, %v706
        %v723 = vadd.f32 %v675, %v707
        %v724 = vadd.f32 %v676, %v708
        %v725 = vadd.f32 %v677, %v709
        %v726 = vadd.f32 %v678, %v710
        %v727 = vadd.f32 %v679, %v711
        %v728 = vadd.f32 %v680, %v712
        %v729 = vadd.f32 %v681, %v713
        %v730 = vadd.f32 %v682, %v714
        %v731 = vadd.f32 %v683, %v715
        %v732 = vadd.f32 %v684, %v716
        %v733 = vadd.f32 %v685, %v701
        %v734 = vadd.f32 %v686, %v702
        %v735 = vadd.f32 %v687, %v703
        %v736 = vadd.f32 %v688, %v704
        %v737 = vadd.f32 %v689, %v705
        %v738 = vadd.f32 %v690, %v706
        %v739 = vadd.f32 %v691, %v707
        %v740 = vadd.f32 %v692, %v708
        %v741 = vadd.f32 %v693, %v709
        %v742 = vadd.f32 %v694, %v710
        %v743 = vadd.f32 %v695, %v711
        %v744 = vadd.f32 %v696, %v712
        %v745 = vadd.f32 %v697, %v713
        %v746 = vadd.f32 %v698, %v714
        %v747 = vadd.f32 %v699, %v715
        %v748 = vadd.f32 %v700, %v716
        %749 = vmax.xlane.f32.xlu0 %v717
        %v750 = vpop.xlane.xlu0 %749
        %751 = vmax.xlane.f32.xlu0 %v718
        %v752 = vpop.xlane.xlu0 %751
        %753 = vmax.xlane.f32.xlu0 %v719
        %v754 = vpop.xlane.xlu0 %753
        %755 = vmax.xlane.f32.xlu0 %v720
        %v756 = vpop.xlane.xlu0 %755
        %757 = vmax.xlane.f32.xlu0 %v721
        %v758 = vpop.xlane.xlu0 %757
        %759 = vmax.xlane.f32.xlu0 %v722
        %v760 = vpop.xlane.xlu0 %759
        %761 = vmax.xlane.f32.xlu0 %v723
        %v762 = vpop.xlane.xlu0 %761
        %763 = vmax.xlane.f32.xlu0 %v724
        %v764 = vpop.xlane.xlu0 %763
        %765 = vmax.xlane.f32.xlu0 %v725
        %v766 = vpop.xlane.xlu0 %765
        %767 = vmax.xlane.f32.xlu0 %v726
        %v768 = vpop.xlane.xlu0 %767
        %769 = vmax.xlane.f32.xlu0 %v727
        %v770 = vpop.xlane.xlu0 %769
        %771 = vmax.xlane.f32.xlu0 %v728
        %v772 = vpop.xlane.xlu0 %771
        %773 = vmax.xlane.f32.xlu0 %v729
        %v774 = vpop.xlane.xlu0 %773
        %775 = vmax.xlane.f32.xlu0 %v730
        %v776 = vpop.xlane.xlu0 %775
        %777 = vmax.xlane.f32.xlu0 %v731
        %v778 = vpop.xlane.xlu0 %777
        %779 = vmax.xlane.f32.xlu0 %v732
        %v780 = vpop.xlane.xlu0 %779
        %781 = vmax.xlane.f32.xlu0 %v733
        %v782 = vpop.xlane.xlu0 %781
        %783 = vmax.xlane.f32.xlu0 %v734
        %v784 = vpop.xlane.xlu0 %783
        %785 = vmax.xlane.f32.xlu0 %v735
        %v786 = vpop.xlane.xlu0 %785
        %787 = vmax.xlane.f32.xlu0 %v736
        %v788 = vpop.xlane.xlu0 %787
        %789 = vmax.xlane.f32.xlu0 %v737
        %v790 = vpop.xlane.xlu0 %789
        %791 = vmax.xlane.f32.xlu0 %v738
        %v792 = vpop.xlane.xlu0 %791
        %793 = vmax.xlane.f32.xlu0 %v739
        %v794 = vpop.xlane.xlu0 %793
        %795 = vmax.xlane.f32.xlu0 %v740
        %v796 = vpop.xlane.xlu0 %795
        %797 = vmax.xlane.f32.xlu0 %v741
        %v798 = vpop.xlane.xlu0 %797
        %799 = vmax.xlane.f32.xlu0 %v742
        %v800 = vpop.xlane.xlu0 %799
        %801 = vmax.xlane.f32.xlu0 %v743
        %v802 = vpop.xlane.xlu0 %801
        %803 = vmax.xlane.f32.xlu0 %v744
        %v804 = vpop.xlane.xlu0 %803
        %805 = vmax.xlane.f32.xlu0 %v745
        %v806 = vpop.xlane.xlu0 %805
        %807 = vmax.xlane.f32.xlu0 %v746
        %v808 = vpop.xlane.xlu0 %807
        %809 = vmax.xlane.f32.xlu0 %v747
        %v810 = vpop.xlane.xlu0 %809
        %811 = vmax.xlane.f32.xlu0 %v748
        %v812 = vpop.xlane.xlu0 %811
        %v813 = vsub.f32 %v717, %v750
        %v814 = vsub.f32 %v718, %v752
        %v815 = vsub.f32 %v719, %v754
        %v816 = vsub.f32 %v720, %v756
        %v817 = vsub.f32 %v721, %v758
        %v818 = vsub.f32 %v722, %v760
        %v819 = vsub.f32 %v723, %v762
        %v820 = vsub.f32 %v724, %v764
        %v821 = vsub.f32 %v725, %v766
        %v822 = vsub.f32 %v726, %v768
        %v823 = vsub.f32 %v727, %v770
        %v824 = vsub.f32 %v728, %v772
        %v825 = vsub.f32 %v729, %v774
        %v826 = vsub.f32 %v730, %v776
        %v827 = vsub.f32 %v731, %v778
        %v828 = vsub.f32 %v732, %v780
        %v829 = vsub.f32 %v733, %v782
        %v830 = vsub.f32 %v734, %v784
        %v831 = vsub.f32 %v735, %v786
        %v832 = vsub.f32 %v736, %v788
        %v833 = vsub.f32 %v737, %v790
        %v834 = vsub.f32 %v738, %v792
        %v835 = vsub.f32 %v739, %v794
        %v836 = vsub.f32 %v740, %v796
        %v837 = vsub.f32 %v741, %v798
        %v838 = vsub.f32 %v742, %v800
        %v839 = vsub.f32 %v743, %v802
        %v840 = vsub.f32 %v744, %v804
        %v841 = vsub.f32 %v745, %v806
        %v842 = vsub.f32 %v746, %v808
        %v843 = vsub.f32 %v747, %v810
        %v844 = vsub.f32 %v748, %v812
        %v845 = vmul.f32 %v813, 1.442695
        %v846 = vpow.pop %v845
        %v847 = vmul.f32 %v814, 1.442695
        %v848 = vpow.pop %v847
        %v849 = vmul.f32 %v815, 1.442695
        %v850 = vpow.pop %v849
        %v851 = vmul.f32 %v816, 1.442695
        %v852 = vpow.pop %v851
        %v853 = vmul.f32 %v817, 1.442695
        %v854 = vpow.pop %v853
        %v855 = vmul.f32 %v818, 1.442695
        %v856 = vpow.pop %v855
        %v857 = vmul.f32 %v819, 1.442695
        %v858 = vpow.pop %v857
        %v859 = vmul.f32 %v820, 1.442695
        %v860 = vpow.pop %v859
        %v861 = vmul.f32 %v821, 1.442695
        %v862 = vpow.pop %v861
        %v863 = vmul.f32 %v822, 1.442695
        %v864 = vpow.pop %v863
        %v865 = vmul.f32 %v823, 1.442695
        %v866 = vpow.pop %v865
        %v867 = vmul.f32 %v824, 1.442695
        %v868 = vpow.pop %v867
        %v869 = vmul.f32 %v825, 1.442695
        %v870 = vpow.pop %v869
        %v871 = vmul.f32 %v826, 1.442695
        %v872 = vpow.pop %v871
        %v873 = vmul.f32 %v827, 1.442695
        %v874 = vpow.pop %v873
        %v875 = vmul.f32 %v828, 1.442695
        %v876 = vpow.pop %v875
        %v877 = vmul.f32 %v829, 1.442695
        %v878 = vpow.pop %v877
        %v879 = vmul.f32 %v830, 1.442695
        %v880 = vpow.pop %v879
        %v881 = vmul.f32 %v831, 1.442695
        %v882 = vpow.pop %v881
        %v883 = vmul.f32 %v832, 1.442695
        %v884 = vpow.pop %v883
        %v885 = vmul.f32 %v833, 1.442695
        %v886 = vpow.pop %v885
        %v887 = vmul.f32 %v834, 1.442695
        %v888 = vpow.pop %v887
        %v889 = vmul.f32 %v835, 1.442695
        %v890 = vpow.pop %v889
        %v891 = vmul.f32 %v836, 1.442695
        %v892 = vpow.pop %v891
        %v893 = vmul.f32 %v837, 1.442695
        %v894 = vpow.pop %v893
        %v895 = vmul.f32 %v838, 1.442695
        %v896 = vpow.pop %v895
        %v897 = vmul.f32 %v839, 1.442695
        %v898 = vpow.pop %v897
        %v899 = vmul.f32 %v840, 1.442695
        %v900 = vpow.pop %v899
        %v901 = vmul.f32 %v841, 1.442695
        %v902 = vpow.pop %v901
        %v903 = vmul.f32 %v842, 1.442695
        %v904 = vpow.pop %v903
        %v905 = vmul.f32 %v843, 1.442695
        %v906 = vpow.pop %v905
        %v907 = vmul.f32 %v844, 1.442695
        %v908 = vpow.pop %v907
        %909 = vadd.xlane.f32.xlu0 %v846
        %v910 = vpop.xlane.xlu0 %909
        %911 = vadd.xlane.f32.xlu0 %v848
        %v912 = vpop.xlane.xlu0 %911
        %913 = vadd.xlane.f32.xlu0 %v850
        %v914 = vpop.xlane.xlu0 %913
        %915 = vadd.xlane.f32.xlu0 %v852
        %v916 = vpop.xlane.xlu0 %915
        %917 = vadd.xlane.f32.xlu0 %v854
        %v918 = vpop.xlane.xlu0 %917
        %919 = vadd.xlane.f32.xlu0 %v856
        %v920 = vpop.xlane.xlu0 %919
        %921 = vadd.xlane.f32.xlu0 %v858
        %v922 = vpop.xlane.xlu0 %921
        %923 = vadd.xlane.f32.xlu0 %v860
        %v924 = vpop.xlane.xlu0 %923
        %925 = vadd.xlane.f32.xlu0 %v862
        %v926 = vpop.xlane.xlu0 %925
        %927 = vadd.xlane.f32.xlu0 %v864
        %v928 = vpop.xlane.xlu0 %927
        %929 = vadd.xlane.f32.xlu0 %v866
        %v930 = vpop.xlane.xlu0 %929
        %931 = vadd.xlane.f32.xlu0 %v868
        %v932 = vpop.xlane.xlu0 %931
        %933 = vadd.xlane.f32.xlu0 %v870
        %v934 = vpop.xlane.xlu0 %933
        %935 = vadd.xlane.f32.xlu0 %v872
        %v936 = vpop.xlane.xlu0 %935
        %937 = vadd.xlane.f32.xlu0 %v874
        %v938 = vpop.xlane.xlu0 %937
        %939 = vadd.xlane.f32.xlu0 %v876
        %v940 = vpop.xlane.xlu0 %939
        %941 = vadd.xlane.f32.xlu0 %v878
        %v942 = vpop.xlane.xlu0 %941
        %943 = vadd.xlane.f32.xlu0 %v880
        %v944 = vpop.xlane.xlu0 %943
        %945 = vadd.xlane.f32.xlu0 %v882
        %v946 = vpop.xlane.xlu0 %945
        %947 = vadd.xlane.f32.xlu0 %v884
        %v948 = vpop.xlane.xlu0 %947
        %949 = vadd.xlane.f32.xlu0 %v886
        %v950 = vpop.xlane.xlu0 %949
        %951 = vadd.xlane.f32.xlu0 %v888
        %v952 = vpop.xlane.xlu0 %951
        %953 = vadd.xlane.f32.xlu0 %v890
        %v954 = vpop.xlane.xlu0 %953
        %955 = vadd.xlane.f32.xlu0 %v892
        %v956 = vpop.xlane.xlu0 %955
        %957 = vadd.xlane.f32.xlu0 %v894
        %v958 = vpop.xlane.xlu0 %957
        %959 = vadd.xlane.f32.xlu0 %v896
        %v960 = vpop.xlane.xlu0 %959
        %961 = vadd.xlane.f32.xlu0 %v898
        %v962 = vpop.xlane.xlu0 %961
        %963 = vadd.xlane.f32.xlu0 %v900
        %v964 = vpop.xlane.xlu0 %963
        %965 = vadd.xlane.f32.xlu0 %v902
        %v966 = vpop.xlane.xlu0 %965
        %967 = vadd.xlane.f32.xlu0 %v904
        %v968 = vpop.xlane.xlu0 %967
        %969 = vadd.xlane.f32.xlu0 %v906
        %v970 = vpop.xlane.xlu0 %969
        %971 = vadd.xlane.f32.xlu0 %v908
        %v972 = vpop.xlane.xlu0 %971
        %v973 = vld [vmem:[%s276] sm:$0xff]
        %v974 = vld [vmem:[%s276 + $0x8] sm:$0xff]
        %v975 = vld [vmem:[%s276 + $0x10] sm:$0xff]
        %v976 = vld [vmem:[%s276 + $0x18] sm:$0xff]
        %v977 = vld [vmem:[%s276 + $0x20] sm:$0xff]
        %v978 = vld [vmem:[%s276 + $0x28] sm:$0xff]
        %v979 = vld [vmem:[%s276 + $0x30] sm:$0xff]
        %v980 = vld [vmem:[%s276 + $0x38] sm:$0xff]
        %v981 = vld [vmem:[%s276 + $0x40] sm:$0xff]
        %v982 = vld [vmem:[%s276 + $0x48] sm:$0xff]
        %v983 = vld [vmem:[%s276 + $0x50] sm:$0xff]
        %v984 = vld [vmem:[%s276 + $0x58] sm:$0xff]
        %v985 = vld [vmem:[%s276 + $0x60] sm:$0xff]
        %v986 = vld [vmem:[%s276 + $0x68] sm:$0xff]
        %v987 = vld [vmem:[%s276 + $0x70] sm:$0xff]
        %v988 = vld [vmem:[%s276 + $0x78] sm:$0xff]
        %v989 = vld [vmem:[%s276 + $0x80] sm:$0xff]
        %v990 = vld [vmem:[%s276 + $0x88] sm:$0xff]
        %v991 = vld [vmem:[%s276 + $0x90] sm:$0xff]
        %v992 = vld [vmem:[%s276 + $0x98] sm:$0xff]
        %v993 = vld [vmem:[%s276 + $0xa0] sm:$0xff]
        %v994 = vld [vmem:[%s276 + $0xa8] sm:$0xff]
        %v995 = vld [vmem:[%s276 + $0xb0] sm:$0xff]
        %v996 = vld [vmem:[%s276 + $0xb8] sm:$0xff]
        %v997 = vld [vmem:[%s276 + $0xc0] sm:$0xff]
        %v998 = vld [vmem:[%s276 + $0xc8] sm:$0xff]
        %v999 = vld [vmem:[%s276 + $0xd0] sm:$0xff]
        %v1000 = vld [vmem:[%s276 + $0xd8] sm:$0xff]
        %v1001 = vld [vmem:[%s276 + $0xe0] sm:$0xff]
        %v1002 = vld [vmem:[%s276 + $0xe8] sm:$0xff]
        %v1003 = vld [vmem:[%s276 + $0xf0] sm:$0xff]
        %v1004 = vld [vmem:[%s276 + $0xf8] sm:$0xff]
        %1005 = vmatprep.subr.mxu0 0.0
        %1006 = vmatpush1.msra.mxu0 %v988
        %1007 = vmatprep.subr.mxu0 0.0
        %1008 = vmatpush1.msra.mxu0 %v987
        %1009 = vmatprep.subr.mxu0 0.0
        %1010 = vmatpush1.msra.mxu0 %v986
        %1011 = vmatprep.subr.mxu0 0.0
        %1012 = vmatpush1.msra.mxu0 %v985
        %1013 = vmatprep.subr.mxu0 0.0
        %1014 = vmatpush1.msra.mxu0 %v984
        %1015 = vmatprep.subr.mxu0 0.0
        %1016 = vmatpush1.msra.mxu0 %v983
        %1017 = vmatprep.subr.mxu0 0.0
        %1018 = vmatpush1.msra.mxu0 %v982
        %1019 = vmatprep.subr.mxu0 0.0
        %1020 = vmatpush1.msra.mxu0 %v981
        %1021 = vmatprep.subr.mxu0 0.0
        %1022 = vmatpush1.msra.mxu0 %v980
        %1023 = vmatprep.subr.mxu0 0.0
        %1024 = vmatpush1.msra.mxu0 %v979
        %1025 = vmatprep.subr.mxu0 0.0
        %1026 = vmatpush1.msra.mxu0 %v978
        %1027 = vmatprep.subr.mxu0 0.0
        %1028 = vmatpush1.msra.mxu0 %v977
        %1029 = vmatprep.subr.mxu0 0.0
        %1030 = vmatpush1.msra.mxu0 %v976
        %1031 = vmatprep.subr.mxu0 0.0
        %1032 = vmatpush1.msra.mxu0 %v975
        %1033 = vmatprep.subr.mxu0 0.0
        %1034 = vmatpush1.msra.mxu0 %v974
        %1035 = vmatprep.subr.mxu0 0.0
        %1036 = vmatpush1.msra.mxu0 %v973
        %1037 = vmatprep.subr.mxu0 0.0
        %1038 = vmatpush2.msra.mxu0 0.0
        %1039 = vmatprep.subr.mxu0 0.0
        %1040 = vmatpush2.msra.mxu0 0.0
        %1041 = vmatprep.subr.mxu0 0.0
        %1042 = vmatpush2.msra.mxu0 0.0
        %1043 = vmatprep.subr.mxu0 0.0
        %1044 = vmatpush2.msra.mxu0 0.0
        %1045 = vmatprep.subr.mxu0 0.0
        %1046 = vmatpush2.msra.mxu0 0.0
        %1047 = vmatprep.subr.mxu0 0.0
        %1048 = vmatpush2.msra.mxu0 0.0
        %1049 = vmatprep.subr.mxu0 0.0
        %1050 = vmatpush2.msra.mxu0 0.0
        %1051 = vmatprep.subr.mxu0 0.0
        %1052 = vmatpush2.msra.mxu0 0.0
        %1053 = vmatprep.subr.mxu0 0.0
        %1054 = vmatpush2.msra.mxu0 0.0
        %1055 = vmatprep.subr.mxu0 0.0
        %1056 = vmatpush2.msra.mxu0 0.0
        %1057 = vmatprep.subr.mxu0 0.0
        %1058 = vmatpush2.msra.mxu0 0.0
        %1059 = vmatprep.subr.mxu0 0.0
        %1060 = vmatpush2.msra.mxu0 0.0
        %1061 = vmatprep.subr.mxu0 0.0
        %1062 = vmatpush2.msra.mxu0 0.0
        %1063 = vmatprep.subr.mxu0 0.0
        %1064 = vmatpush2.msra.mxu0 0.0
        %1065 = vmatprep.subr.mxu0 0.0
        %1066 = vmatpush2.msra.mxu0 0.0
        %1067 = vmatprep.subr.mxu0 0.0
        %1068 = vmatpush2.msra.mxu0 0.0
        %1069 = vmatprep.mubr.f32.mxu0 0.0
        %1070 = vmatmul.mubr.f32.gmra.mxu0 %v846
        %v1071 = vpop.f32.mrf.mxu0
        %v1072 = vadd.f32 0.0, %v1071
        %v1073 = vpop.f32.mrf.mxu0
        %1074 = vmatprep.mubr.f32.mxu0 0.0
        %1075 = vmatmul.mubr.f32.gmra.mxu0 %v848
        %v1076 = vpop.f32.mrf.mxu0
        %v1077 = vadd.f32 0.0, %v1076
        %v1078 = vpop.f32.mrf.mxu0
        %1079 = vmatprep.mubr.f32.mxu0 0.0
        %1080 = vmatmul.mubr.f32.gmra.mxu0 %v850
        %v1081 = vpop.f32.mrf.mxu0
        %v1082 = vadd.f32 0.0, %v1081
        %v1083 = vpop.f32.mrf.mxu0
        %1084 = vmatprep.mubr.f32.mxu0 0.0
        %1085 = vmatmul.mubr.f32.gmra.mxu0 %v852
        %v1086 = vpop.f32.mrf.mxu0
        %v1087 = vadd.f32 0.0, %v1086
        %v1088 = vpop.f32.mrf.mxu0
        %1089 = vmatprep.mubr.f32.mxu0 0.0
        %1090 = vmatmul.mubr.f32.gmra.mxu0 %v854
        %v1091 = vpop.f32.mrf.mxu0
        %v1092 = vadd.f32 0.0, %v1091
        %v1093 = vpop.f32.mrf.mxu0
        %1094 = vmatprep.mubr.f32.mxu0 0.0
        %1095 = vmatmul.mubr.f32.gmra.mxu0 %v856
        %v1096 = vpop.f32.mrf.mxu0
        %v1097 = vadd.f32 0.0, %v1096
        %v1098 = vpop.f32.mrf.mxu0
        %1099 = vmatprep.mubr.f32.mxu0 0.0
        %1100 = vmatmul.mubr.f32.gmra.mxu0 %v858
        %v1101 = vpop.f32.mrf.mxu0
        %v1102 = vadd.f32 0.0, %v1101
        %v1103 = vpop.f32.mrf.mxu0
        %1104 = vmatprep.mubr.f32.mxu0 0.0
        %1105 = vmatmul.mubr.f32.gmra.mxu0 %v860
        %v1106 = vpop.f32.mrf.mxu0
        %v1107 = vadd.f32 0.0, %v1106
        %v1108 = vpop.f32.mrf.mxu0
        %1109 = vmatprep.mubr.f32.mxu0 0.0
        %1110 = vmatmul.mubr.f32.gmra.mxu0 %v862
        %v1111 = vpop.f32.mrf.mxu0
        %v1112 = vadd.f32 0.0, %v1111
        %v1113 = vpop.f32.mrf.mxu0
        %1114 = vmatprep.mubr.f32.mxu0 0.0
        %1115 = vmatmul.mubr.f32.gmra.mxu0 %v864
        %v1116 = vpop.f32.mrf.mxu0
        %v1117 = vadd.f32 0.0, %v1116
        %v1118 = vpop.f32.mrf.mxu0
        %1119 = vmatprep.mubr.f32.mxu0 0.0
        %1120 = vmatmul.mubr.f32.gmra.mxu0 %v866
        %v1121 = vpop.f32.mrf.mxu0
        %v1122 = vadd.f32 0.0, %v1121
        %v1123 = vpop.f32.mrf.mxu0
        %1124 = vmatprep.mubr.f32.mxu0 0.0
        %1125 = vmatmul.mubr.f32.gmra.mxu0 %v868
        %v1126 = vpop.f32.mrf.mxu0
        %v1127 = vadd.f32 0.0, %v1126
        %v1128 = vpop.f32.mrf.mxu0
        %1129 = vmatprep.mubr.f32.mxu0 0.0
        %1130 = vmatmul.mubr.f32.gmra.mxu0 %v870
        %v1131 = vpop.f32.mrf.mxu0
        %v1132 = vadd.f32 0.0, %v1131
        %v1133 = vpop.f32.mrf.mxu0
        %1134 = vmatprep.mubr.f32.mxu0 0.0
        %1135 = vmatmul.mubr.f32.gmra.mxu0 %v872
        %v1136 = vpop.f32.mrf.mxu0
        %v1137 = vadd.f32 0.0, %v1136
        %v1138 = vpop.f32.mrf.mxu0
        %1139 = vmatprep.mubr.f32.mxu0 0.0
        %1140 = vmatmul.mubr.f32.gmra.mxu0 %v874
        %v1141 = vpop.f32.mrf.mxu0
        %v1142 = vadd.f32 0.0, %v1141
        %v1143 = vpop.f32.mrf.mxu0
        %1144 = vmatprep.mubr.f32.mxu0 0.0
        %1145 = vmatmul.mubr.f32.gmra.mxu0 %v876
        %v1146 = vpop.f32.mrf.mxu0
        %v1147 = vadd.f32 0.0, %v1146
        %v1148 = vpop.f32.mrf.mxu0
        %1149 = vdwg.mxu0
        %1150 = vmatprep.subr.mxu0 0.0
        %1151 = vmatpush1.msra.mxu0 %v1004
        %1152 = vmatprep.subr.mxu0 0.0
        %1153 = vmatpush1.msra.mxu0 %v1003
        %1154 = vmatprep.subr.mxu0 0.0
        %1155 = vmatpush1.msra.mxu0 %v1002
        %1156 = vmatprep.subr.mxu0 0.0
        %1157 = vmatpush1.msra.mxu0 %v1001
        %1158 = vmatprep.subr.mxu0 0.0
        %1159 = vmatpush1.msra.mxu0 %v1000
        %1160 = vmatprep.subr.mxu0 0.0
        %1161 = vmatpush1.msra.mxu0 %v999
        %1162 = vmatprep.subr.mxu0 0.0
        %1163 = vmatpush1.msra.mxu0 %v998
        %1164 = vmatprep.subr.mxu0 0.0
        %1165 = vmatpush1.msra.mxu0 %v997
        %1166 = vmatprep.subr.mxu0 0.0
        %1167 = vmatpush1.msra.mxu0 %v996
        %1168 = vmatprep.subr.mxu0 0.0
        %1169 = vmatpush1.msra.mxu0 %v995
        %1170 = vmatprep.subr.mxu0 0.0
        %1171 = vmatpush1.msra.mxu0 %v994
        %1172 = vmatprep.subr.mxu0 0.0
        %1173 = vmatpush1.msra.mxu0 %v993
        %1174 = vmatprep.subr.mxu0 0.0
        %1175 = vmatpush1.msra.mxu0 %v992
        %1176 = vmatprep.subr.mxu0 0.0
        %1177 = vmatpush1.msra.mxu0 %v991
        %1178 = vmatprep.subr.mxu0 0.0
        %1179 = vmatpush1.msra.mxu0 %v990
        %1180 = vmatprep.subr.mxu0 0.0
        %1181 = vmatpush1.msra.mxu0 %v989
        %1182 = vmatprep.subr.mxu0 0.0
        %1183 = vmatpush2.msra.mxu0 0.0
        %1184 = vmatprep.subr.mxu0 0.0
        %1185 = vmatpush2.msra.mxu0 0.0
        %1186 = vmatprep.subr.mxu0 0.0
        %1187 = vmatpush2.msra.mxu0 0.0
        %1188 = vmatprep.subr.mxu0 0.0
        %1189 = vmatpush2.msra.mxu0 0.0
        %1190 = vmatprep.subr.mxu0 0.0
        %1191 = vmatpush2.msra.mxu0 0.0
        %1192 = vmatprep.subr.mxu0 0.0
        %1193 = vmatpush2.msra.mxu0 0.0
        %1194 = vmatprep.subr.mxu0 0.0
        %1195 = vmatpush2.msra.mxu0 0.0
        %1196 = vmatprep.subr.mxu0 0.0
        %1197 = vmatpush2.msra.mxu0 0.0
        %1198 = vmatprep.subr.mxu0 0.0
        %1199 = vmatpush2.msra.mxu0 0.0
        %1200 = vmatprep.subr.mxu0 0.0
        %1201 = vmatpush2.msra.mxu0 0.0
        %1202 = vmatprep.subr.mxu0 0.0
        %1203 = vmatpush2.msra.mxu0 0.0
        %1204 = vmatprep.subr.mxu0 0.0
        %1205 = vmatpush2.msra.mxu0 0.0
        %1206 = vmatprep.subr.mxu0 0.0
        %1207 = vmatpush2.msra.mxu0 0.0
        %1208 = vmatprep.subr.mxu0 0.0
        %1209 = vmatpush2.msra.mxu0 0.0
        %1210 = vmatprep.subr.mxu0 0.0
        %1211 = vmatpush2.msra.mxu0 0.0
        %1212 = vmatprep.subr.mxu0 0.0
        %1213 = vmatpush2.msra.mxu0 0.0
        %1214 = vmatprep.mubr.f32.mxu0 0.0
        %1215 = vmatmul.mubr.f32.gmra.mxu0 %v878
        %v1216 = vpop.f32.mrf.mxu0
        %v1217 = vadd.f32 0.0, %v1216
        %v1218 = vpop.f32.mrf.mxu0
        %1219 = vmatprep.mubr.f32.mxu0 0.0
        %1220 = vmatmul.mubr.f32.gmra.mxu0 %v880
        %v1221 = vpop.f32.mrf.mxu0
        %v1222 = vadd.f32 0.0, %v1221
        %v1223 = vpop.f32.mrf.mxu0
        %1224 = vmatprep.mubr.f32.mxu0 0.0
        %1225 = vmatmul.mubr.f32.gmra.mxu0 %v882
        %v1226 = vpop.f32.mrf.mxu0
        %v1227 = vadd.f32 0.0, %v1226
        %v1228 = vpop.f32.mrf.mxu0
        %1229 = vmatprep.mubr.f32.mxu0 0.0
        %1230 = vmatmul.mubr.f32.gmra.mxu0 %v884
        %v1231 = vpop.f32.mrf.mxu0
        %v1232 = vadd.f32 0.0, %v1231
        %v1233 = vpop.f32.mrf.mxu0
        %1234 = vmatprep.mubr.f32.mxu0 0.0
        %1235 = vmatmul.mubr.f32.gmra.mxu0 %v886
        %v1236 = vpop.f32.mrf.mxu0
        %v1237 = vadd.f32 0.0, %v1236
        %v1238 = vpop.f32.mrf.mxu0
        %1239 = vmatprep.mubr.f32.mxu0 0.0
        %1240 = vmatmul.mubr.f32.gmra.mxu0 %v888
        %v1241 = vpop.f32.mrf.mxu0
        %v1242 = vadd.f32 0.0, %v1241
        %v1243 = vpop.f32.mrf.mxu0
        %1244 = vmatprep.mubr.f32.mxu0 0.0
        %1245 = vmatmul.mubr.f32.gmra.mxu0 %v890
        %v1246 = vpop.f32.mrf.mxu0
        %v1247 = vadd.f32 0.0, %v1246
        %v1248 = vpop.f32.mrf.mxu0
        %1249 = vmatprep.mubr.f32.mxu0 0.0
        %1250 = vmatmul.mubr.f32.gmra.mxu0 %v892
        %v1251 = vpop.f32.mrf.mxu0
        %v1252 = vadd.f32 0.0, %v1251
        %v1253 = vpop.f32.mrf.mxu0
        %1254 = vmatprep.mubr.f32.mxu0 0.0
        %1255 = vmatmul.mubr.f32.gmra.mxu0 %v894
        %v1256 = vpop.f32.mrf.mxu0
        %v1257 = vadd.f32 0.0, %v1256
        %v1258 = vpop.f32.mrf.mxu0
        %1259 = vmatprep.mubr.f32.mxu0 0.0
        %1260 = vmatmul.mubr.f32.gmra.mxu0 %v896
        %v1261 = vpop.f32.mrf.mxu0
        %v1262 = vadd.f32 0.0, %v1261
        %v1263 = vpop.f32.mrf.mxu0
        %1264 = vmatprep.mubr.f32.mxu0 0.0
        %1265 = vmatmul.mubr.f32.gmra.mxu0 %v898
        %v1266 = vpop.f32.mrf.mxu0
        %v1267 = vadd.f32 0.0, %v1266
        %v1268 = vpop.f32.mrf.mxu0
        %1269 = vmatprep.mubr.f32.mxu0 0.0
        %1270 = vmatmul.mubr.f32.gmra.mxu0 %v900
        %v1271 = vpop.f32.mrf.mxu0
        %v1272 = vadd.f32 0.0, %v1271
        %v1273 = vpop.f32.mrf.mxu0
        %1274 = vmatprep.mubr.f32.mxu0 0.0
        %1275 = vmatmul.mubr.f32.gmra.mxu0 %v902
        %v1276 = vpop.f32.mrf.mxu0
        %v1277 = vadd.f32 0.0, %v1276
        %v1278 = vpop.f32.mrf.mxu0
        %1279 = vmatprep.mubr.f32.mxu0 0.0
        %1280 = vmatmul.mubr.f32.gmra.mxu0 %v904
        %v1281 = vpop.f32.mrf.mxu0
        %v1282 = vadd.f32 0.0, %v1281
        %v1283 = vpop.f32.mrf.mxu0
        %1284 = vmatprep.mubr.f32.mxu0 0.0
        %1285 = vmatmul.mubr.f32.gmra.mxu0 %v906
        %v1286 = vpop.f32.mrf.mxu0
        %v1287 = vadd.f32 0.0, %v1286
        %v1288 = vpop.f32.mrf.mxu0
        %1289 = vmatprep.mubr.f32.mxu0 0.0
        %1290 = vmatmul.mubr.f32.gmra.mxu0 %v908
        %v1291 = vpop.f32.mrf.mxu0
        %v1292 = vadd.f32 0.0, %v1291
        %v1293 = vpop.f32.mrf.mxu0
        %1294 = vdwg.mxu0
        %v1295 = vrcp.pop %v910
        %v1296 = vrcp.pop %v912
        %v1297 = vrcp.pop %v914
        %v1298 = vrcp.pop %v916
        %v1299 = vrcp.pop %v918
        %v1300 = vrcp.pop %v920
        %v1301 = vrcp.pop %v922
        %v1302 = vrcp.pop %v924
        %v1303 = vrcp.pop %v926
        %v1304 = vrcp.pop %v928
        %v1305 = vrcp.pop %v930
        %v1306 = vrcp.pop %v932
        %v1307 = vrcp.pop %v934
        %v1308 = vrcp.pop %v936
        %v1309 = vrcp.pop %v938
        %v1310 = vrcp.pop %v940
        %v1311 = vrcp.pop %v942
        %v1312 = vrcp.pop %v944
        %v1313 = vrcp.pop %v946
        %v1314 = vrcp.pop %v948
        %v1315 = vrcp.pop %v950
        %v1316 = vrcp.pop %v952
        %v1317 = vrcp.pop %v954
        %v1318 = vrcp.pop %v956
        %v1319 = vrcp.pop %v958
        %v1320 = vrcp.pop %v960
        %v1321 = vrcp.pop %v962
        %v1322 = vrcp.pop %v964
        %v1323 = vrcp.pop %v966
        %v1324 = vrcp.pop %v968
        %v1325 = vrcp.pop %v970
        %v1326 = vrcp.pop %v972
        %v1327 = vmul.f32 %v1072, %v1295
        %v1328 = vmul.f32 %v1077, %v1296
        %v1329 = vmul.f32 %v1082, %v1297
        %v1330 = vmul.f32 %v1087, %v1298
        %v1331 = vmul.f32 %v1092, %v1299
        %v1332 = vmul.f32 %v1097, %v1300
        %v1333 = vmul.f32 %v1102, %v1301
        %v1334 = vmul.f32 %v1107, %v1302
        %v1335 = vmul.f32 %v1112, %v1303
        %v1336 = vmul.f32 %v1117, %v1304
        %v1337 = vmul.f32 %v1122, %v1305
        %v1338 = vmul.f32 %v1127, %v1306
        %v1339 = vmul.f32 %v1132, %v1307
        %v1340 = vmul.f32 %v1137, %v1308
        %v1341 = vmul.f32 %v1142, %v1309
        %v1342 = vmul.f32 %v1147, %v1310
        %v1343 = vmul.f32 %v1217, %v1311
        %v1344 = vmul.f32 %v1222, %v1312
        %v1345 = vmul.f32 %v1227, %v1313
        %v1346 = vmul.f32 %v1232, %v1314
        %v1347 = vmul.f32 %v1237, %v1315
        %v1348 = vmul.f32 %v1242, %v1316
        %v1349 = vmul.f32 %v1247, %v1317
        %v1350 = vmul.f32 %v1252, %v1318
        %v1351 = vmul.f32 %v1257, %v1319
        %v1352 = vmul.f32 %v1262, %v1320
        %v1353 = vmul.f32 %v1267, %v1321
        %v1354 = vmul.f32 %v1272, %v1322
        %v1355 = vmul.f32 %v1277, %v1323
        %v1356 = vmul.f32 %v1282, %v1324
        %v1357 = vmul.f32 %v1287, %v1325
        %v1358 = vmul.f32 %v1292, %v1326
        %1359 = vst [vmem:[%s310] sm:$0xff] %v1327
        %1360 = vst [vmem:[%s310 + $0x8] sm:$0xff] %v1328
        %1361 = vst [vmem:[%s310 + $0x10] sm:$0xff] %v1329
        %1362 = vst [vmem:[%s310 + $0x18] sm:$0xff] %v1330
        %1363 = vst [vmem:[%s310 + $0x20] sm:$0xff] %v1331
        %1364 = vst [vmem:[%s310 + $0x28] sm:$0xff] %v1332
        %1365 = vst [vmem:[%s310 + $0x30] sm:$0xff] %v1333
        %1366 = vst [vmem:[%s310 + $0x38] sm:$0xff] %v1334
        %1367 = vst [vmem:[%s310 + $0x40] sm:$0xff] %v1335
        %1368 = vst [vmem:[%s310 + $0x48] sm:$0xff] %v1336
        %1369 = vst [vmem:[%s310 + $0x50] sm:$0xff] %v1337
        %1370 = vst [vmem:[%s310 + $0x58] sm:$0xff] %v1338
        %1371 = vst [vmem:[%s310 + $0x60] sm:$0xff] %v1339
        %1372 = vst [vmem:[%s310 + $0x68] sm:$0xff] %v1340
        %1373 = vst [vmem:[%s310 + $0x70] sm:$0xff] %v1341
        %1374 = vst [vmem:[%s310 + $0x78] sm:$0xff] %v1342
        %1375 = vst [vmem:[%s310 + $0x80] sm:$0xff] %v1343
        %1376 = vst [vmem:[%s310 + $0x88] sm:$0xff] %v1344
        %1377 = vst [vmem:[%s310 + $0x90] sm:$0xff] %v1345
        %1378 = vst [vmem:[%s310 + $0x98] sm:$0xff] %v1346
        %1379 = vst [vmem:[%s310 + $0xa0] sm:$0xff] %v1347
        %1380 = vst [vmem:[%s310 + $0xa8] sm:$0xff] %v1348
        %1381 = vst [vmem:[%s310 + $0xb0] sm:$0xff] %v1349
        %1382 = vst [vmem:[%s310 + $0xb8] sm:$0xff] %v1350
        %1383 = vst [vmem:[%s310 + $0xc0] sm:$0xff] %v1351
        %1384 = vst [vmem:[%s310 + $0xc8] sm:$0xff] %v1352
        %1385 = vst [vmem:[%s310 + $0xd0] sm:$0xff] %v1353
        %1386 = vst [vmem:[%s310 + $0xd8] sm:$0xff] %v1354
        %1387 = vst [vmem:[%s310 + $0xe0] sm:$0xff] %v1355
        %1388 = vst [vmem:[%s310 + $0xe8] sm:$0xff] %v1356
        %1389 = vst [vmem:[%s310 + $0xf0] sm:$0xff] %v1357
        %1390 = vst [vmem:[%s310 + $0xf8] sm:$0xff] %v1358
        %s1391 = sand.u32 %s132, 1
        %s1392 = scalar_lea.sflag [#allocation4], %s1391
        %s1393 = sand.u32 %s132, 1
        %s1394 = smul.addr %s1393, 256
        %s1395 = scalar_lea.vmem [#allocation10], %s1394
        // Predicated region
        $region53: #{tpu_custom_call.1} parent=35 // pred_check
          %p1396 = pneg %p142
        $region54: #{tpu_custom_call.1} parent=35 // pred_check_branch
          %1398 = sbr.rel (%p1396) target = $region56
        $region55: #{tpu_custom_call.1} parent=35 // pred_region
          %s1399 = smul.u32 2, %s25
          %s1401 = ssub.s32 4096, 4096
          %1402 = vsyncadd %s1392, %s1401
          %s1403 = smul.addr %s1399, 16
          %s1404 = smul.addr %s1403, 128
          %s1405 = scalar_lea.hbm %s4, %s1404
          %s1406 = sshll.u32 %s1395, 4
          %s1407 = int_to_ptr.vmem [resolvable:$true] %s1406
          %1412 = dma.vmem_to_hbm [thread:$0]  %s1407, 4096, %s1405, %s1392, 128, 128, 8
        $region56: #{tpu_custom_call.1} parent=35 // pred_fallthru
          _
      $region36: #{tpu_custom_call.1} parent=5 // pred_fallthru
        _
      %p1413 = scmp.le.s32.totalorder 2, %s20
      // Predicated region
      $region57: #{tpu_custom_call.1} parent=5 // pred_check
        %p1414 = pneg %p1413
      $region58: #{tpu_custom_call.1} parent=5 // pred_check_branch
        %1416 = sbr.rel (%p1414) target = $region60
      $region59: #{tpu_custom_call.1} parent=5 // pred_region
        %s1417 = ssub.s32 %s20, 2
        // Predicated region
        $region61: #{tpu_custom_call.1} parent=59 // pred_check
          %p1418 = pneg %p148
        $region62: #{tpu_custom_call.1} parent=59 // pred_check_branch
          %1420 = sbr.rel (%p1418) target = $region64
        $region63: #{tpu_custom_call.1} parent=59 // pred_region
          %s1421 = sand.u32 %s133, 1
          %s1422 = scalar_lea.sflag [#allocation4], %s1421
          %s1423 = sand.u32 %s133, 1
          %s1424 = smul.addr %s1423, 256
          %s1425 = scalar_lea.vmem [#allocation10], %s1424
          %1426 = dma.done %s1422, 4096
        $region64: #{tpu_custom_call.1} parent=59 // pred_fallthru
          _
      $region60: #{tpu_custom_call.1} parent=5 // pred_fallthru
        _
    $region6: #{tpu_custom_call.1} parent=1 // loop_footer
      %s24 = sadd.s32 1, %s20
    $region7: #{tpu_custom_call.1} parent=1 // loop_footer_branch
      %19 = sbr.rel target = $region3
    $region8: #{tpu_custom_call.1} parent=1 // loop_exit
      _
    %1427 = vsyncpa [#allocation3], 1
    %s1428 = scalar_lea.sflag [#allocation3], 1
    %1429 = vsyncpa %s1428, 1
    %1430 = vsyncpa [#allocation6], 1
    %s1431 = scalar_lea.sflag [#allocation6], 1
    %1432 = vsyncpa %s1431, 1
    %1433 = vsyncpa [#allocation9], 1
    %s1434 = scalar_lea.sflag [#allocation9], 1
    %1435 = vsyncpa %s1434, 1
    %1436 = vsyncpa [#allocation4], 1
    %s1437 = scalar_lea.sflag [#allocation4], 1
    %1438 = vsyncpa %s1437, 1

</llo_original>
